<compile_context>
chip_gen: v7x
topology: tpu7x:2x2x1
jax: 0.10.0
libtpu: 0.0.40
codegen_flags: <defaults>
</compile_context>

<pallas_src>
import math
import functools

import jax
import jax.numpy as jnp
import numpy as np
from jax import lax
from jax.experimental import pallas as pl
from jax.experimental.pallas import tpu as pltpu


def _silu(x):
    return x * jax.nn.sigmoid(x)


def _softplus(x):
    # matches torch.nn.functional.softplus (threshold=20)
    return jnp.where(x > 20.0, x, jnp.log1p(jnp.exp(x)))


# ---------------------------------------------------------------------------
# Pallas kernel
# ---------------------------------------------------------------------------
def mamba_block_kernel(x_ref, w_in_ref, conv_w_ref, conv_b_ref, w_x_ref,
                       w_delta_ref, b_delta_ref, a_log_ref, d_ref, w_out_ref,
                       out_ref,
                       h_scr, conv_scr, a_scr, db_scr, cm_scr, y_scr,
                       *, Tc, C, N, R, K, CT, PAD):
    first = pl.program_id(1) == 0

    # --- init persistent cross-chunk state at the first chunk of each batch.
    @pl.when(first)
    def _init():
        h_scr[...] = jnp.zeros((N, C), jnp.float32)
        conv_scr[0:PAD, :] = jnp.zeros((PAD, C), jnp.float32)

    x = x_ref[0]                                            # (Tc, Din) f32

    # --- input projection (MXU, bf16 in / f32 accum): -> x-path | residual
    xz = jnp.dot(x.astype(jnp.bfloat16), w_in_ref[...],
                 preferred_element_type=jnp.float32)        # (Tc, 2C) f32
    xp = xz[:, :C]                                          # (Tc, C)
    res = xz[:, C:]                                         # (Tc, C)

    # --- causal depthwise conv (groups=C) with cross-chunk halo + SiLU.
    # conv_scr rows [PAD-(K-1), PAD) hold the previous chunk's last K-1 xp
    # rows (zeros on the first chunk = zero left padding); rows [PAD, PAD+Tc)
    # hold this chunk's xp.
    conv_scr[PAD:PAD + Tc, :] = xp
    acc = conv_b_ref[...]                                   # (1, C), broadcast
    for k in range(K):                                      # K is tiny/static
        off = PAD - (K - 1) + k
        acc = acc + conv_w_ref[k:k + 1, :] * conv_scr[off:off + Tc, :]
    if K > 1:                                               # stash next halo
        conv_scr[PAD - (K - 1):PAD, :] = xp[Tc - (K - 1):, :]
    xc = _silu(acc)                                         # (Tc, C)

    # --- x projection (MXU) -> (delta_lowrank | B | C)
    dbc = jnp.dot(xc.astype(jnp.bfloat16), w_x_ref[...],
                  preferred_element_type=jnp.float32)       # (Tc, R+2N)
    delta_r = dbc[:, :R]                                    # (Tc, R)
    Bm = dbc[:, R:R + N]                                    # (Tc, N)
    Cm = dbc[:, R + N:R + 2 * N]                            # (Tc, N)

    # --- delta projection: MXU for realistic ranks, broadcast-FMA for tiny R.
    if R >= 8:
        delta_lin = jnp.dot(delta_r.astype(jnp.bfloat16),
                            w_delta_ref[...].astype(jnp.bfloat16),
                            preferred_element_type=jnp.float32) + b_delta_ref[...]
    else:
        delta_lin = delta_r[:, 0:1] * w_delta_ref[0:1, :] + b_delta_ref[...]
        for r in range(1, R):
            delta_lin = delta_lin + delta_r[:, r:r + 1] * w_delta_ref[r:r + 1, :]
    delta = _softplus(delta_lin)                            # (Tc, C) f32

    # --- discretization for this chunk, (N, C) layout (lanes = C), all f32.
    a_exp = jnp.exp(a_log_ref[...])                         # (N, C)
    a_scr[...] = jnp.exp(-delta[:, None, :] * a_exp[None, :, :])   # (Tc, N, C)
    db_scr[...] = (delta * xc)[:, None, :] * Bm[:, :, None]        # (Tc, N, C)
    cm_scr[...] = Cm[:, :, None]                                    # (Tc, N, 1)

    # Reference semantics: hs[0] = 0, i.e. A[0]/dB[0] of the whole sequence
    # are never applied -> zero dB[0] on the first chunk (h is already 0).
    @pl.when(first)
    def _zero_first_step():
        db_scr[0, :, :] = jnp.zeros((N, C), jnp.float32)

    # --- sequential SSM scan: hidden state carried in vregs, tiled over C so
    # the (N, CT) carry never spills (vreg file = 64 x 4 KiB on all gens).
    num_ct = C // CT
    carry_bytes = N * CT * 4
    unroll = 8 if carry_bytes <= 16 * 1024 else (4 if carry_bytes <= 32 * 1024 else 2)

    for ci in range(num_ct):                                # static C tiling
        c0 = ci * CT

        def body(t, h, c0=c0):
            h = a_scr[t, :, c0:c0 + CT] * h + db_scr[t, :, c0:c0 + CT]
            # readout (mult + sublane reduce + store) is off the carry path
            y_scr[pl.ds(t, 1), c0:c0 + CT] = jnp.sum(
                h * cm_scr[t], axis=0, keepdims=True)
            return h

        h_fin = lax.fori_loop(0, Tc, body, h_scr[:, c0:c0 + CT], unroll=unroll)
        h_scr[:, c0:c0 + CT] = h_fin                        # persist for next chunk

    y = y_scr[...] + d_ref[...] * xc                        # (Tc, C)

    # --- gate with SiLU(res) and output projection (MXU, bf16 in / f32 acc).
    gated = (y * _silu(res)).astype(jnp.bfloat16)
    out = jnp.dot(gated, w_out_ref[...], preferred_element_type=jnp.float32)
    out_ref[0] = out.astype(out_ref.dtype)


# ---------------------------------------------------------------------------
# Tiling heuristics (generation aware)
# ---------------------------------------------------------------------------
def _pick_seq_chunk(L, cap):
    if L <= cap:
        return L
    tc = (min(cap, L) // 8) * 8
    while tc >= 8:
        if L % tc == 0:
            return tc
        tc -= 8
    return L


def _pick_c_tile(C, cap=512):
    if C <= cap:
        return C
    ct = (cap // 128) * 128
    while ct >= 128:
        if C % ct == 0:
            return ct
        ct -= 128
    return C


def _pick_vmem_and_chunk(L, N, C):
    """Per-generation VMEM budget and sequence-chunk size."""
    try:
        kind = jax.devices()[0].device_kind.lower()
    except Exception:
        kind = ""
    if "v7" in kind:                       # 64 MiB physical VMEM per core
        vmem_limit = 48 * 1024 * 1024
    elif "v5" in kind or "v6" in kind:     # 128 MiB physical VMEM
        vmem_limit = 96 * 1024 * 1024
    else:
        vmem_limit = 32 * 1024 * 1024
    lane = 128
    cpad = ((C + lane - 1) // lane) * lane
    per_t = 4 * (2 * N * cpad + N * lane + cpad)   # A + dB + Cm + y per step
    cap = max(8, (vmem_limit // 3) // per_t)
    return vmem_limit, _pick_seq_chunk(L, cap)


# ---------------------------------------------------------------------------
# Wrapper
# ---------------------------------------------------------------------------
def mamba_block_forward(x, params, *, seq_chunk=None, vmem_limit_bytes=None):
    B, L, Din = x.shape
    C = params['w_out'].shape[0]
    N = params['a_log'].shape[0]          # a_log stored as (N, C)
    K = params['conv_w'].shape[0]
    R = params['w_delta'].shape[0]

    auto_vmem, auto_tc = _pick_vmem_and_chunk(L, N, C)
    Tc = seq_chunk if seq_chunk is not None else auto_tc
    vmem = vmem_limit_bytes if vmem_limit_bytes is not None else auto_vmem
    assert L % Tc == 0, "sequence length must be divisible by the chunk size"
    CT = _pick_c_tile(C)
    assert C % CT == 0
    PAD = max(8, ((K - 1 + 7) // 8) * 8)
    nchunks = L // Tc

    kernel = functools.partial(mamba_block_kernel, Tc=Tc, C=C, N=N, R=R, K=K,
                               CT=CT, PAD=PAD)

    def wspec(p):
        # grid-invariant weight block (stays resident across the whole grid)
        return pl.BlockSpec(p.shape, lambda b, c: (0, 0))

    grid_spec = pltpu.PrefetchScalarGridSpec(
        num_scalar_prefetch=0,
        grid=(B, nchunks),
        in_specs=[
            pl.BlockSpec((1, Tc, Din), lambda b, c: (b, c, 0)),   # x chunk
            wspec(params['w_in']),
            wspec(params['conv_w']),
            wspec(params['conv_b']),
            wspec(params['w_x']),
            wspec(params['w_delta']),
            wspec(params['b_delta']),
            wspec(params['a_log']),
            wspec(params['d']),
            wspec(params['w_out']),
        ],
        out_specs=pl.BlockSpec((1, Tc, Din), lambda b, c: (b, c, 0)),
        scratch_shapes=[
            pltpu.VMEM((N, C), jnp.float32),          # persistent hidden state
            pltpu.VMEM((Tc + PAD, C), jnp.float32),   # conv staging + halo
            pltpu.VMEM((Tc, N, C), jnp.float32),      # A        (per chunk)
            pltpu.VMEM((Tc, N, C), jnp.float32),      # delta*B*x (per chunk)
            pltpu.VMEM((Tc, N, 1), jnp.float32),      # Cm       (per chunk)
            pltpu.VMEM((Tc, C), jnp.float32),         # y        (per chunk)
        ],
    )

    # Advisory cost estimate (HBM traffic only; VMEM scratch not counted).
    flops = B * (2 * L * Din * 2 * C + 2 * L * C * K + 2 * L * C * (R + 2 * N)
                 + 2 * L * R * C + 8 * L * C * N + 2 * L * C * Din)
    transc = B * (L * C * N + 4 * L * C)
    nbytes = int(4 * 2 * B * L * Din
                 + sum(int(p.size) * p.dtype.itemsize for p in params.values()))
    cost = pl.CostEstimate(flops=flops, transcendentals=transc,
                           bytes_accessed=nbytes)

    return pl.pallas_call(
        kernel,
        out_shape=jax.ShapeDtypeStruct((B, L, Din), jnp.float32),
        grid_spec=grid_spec,
        compiler_params=pltpu.CompilerParams(
            dimension_semantics=("parallel", "arbitrary"),
            vmem_limit_bytes=vmem),
        cost_estimate=cost,
    )(x, params['w_in'], params['conv_w'], params['conv_b'], params['w_x'],
      params['w_delta'], params['b_delta'], params['a_log'], params['d'],
      params['w_out'])


# ---------------------------------------------------------------------------
# Deterministic parameter construction (shapes per MambaBlock.__init__)
# ---------------------------------------------------------------------------
def init_params(key, in_channels=8, state_channels=16, expansion=2,
                kernel_size=4):
    C = in_channels * expansion
    N = state_channels
    R = math.ceil(in_channels / 16)
    ks = jax.random.split(key, 7)

    def u(k, shape, bound):
        return jax.random.uniform(k, shape, jnp.float32, -bound, bound)

    # MXU weights stored bf16 (kernel accumulates in f32).
    w_in = u(ks[0], (in_channels, 2 * C), in_channels ** -0.5).astype(jnp.bfloat16)
    w_out = u(ks[1], (C, in_channels), C ** -0.5).astype(jnp.bfloat16)
    w_x = u(ks[4], (C, R + 2 * N), C ** -0.5).astype(jnp.bfloat16)
    # small / recurrence-critical params stay f32
    conv_w = u(ks[2], (kernel_size, C), kernel_size ** -0.5)       # tap-major
    conv_b = u(ks[3], (1, C), kernel_size ** -0.5)
    # stored (N, C): transpose of the PyTorch (C, N) parameter
    a_log = jnp.tile(jnp.log(jnp.arange(1, N + 1, dtype=jnp.float32))[:, None],
                     (1, C))                                       # (N, C)
    d = jnp.ones((1, C), jnp.float32)
    w_delta = u(ks[5], (R, C), R ** -0.5)                          # proj_delta.T
    dt = jnp.exp(jax.random.uniform(ks[6], (C,), jnp.float32) *
                 (math.log(0.1) - math.log(0.001)) + math.log(0.001))
    dt = jnp.maximum(dt, 1e-4)
    b_delta = (dt + jnp.log(-jnp.expm1(-dt)))[None, :]             # (1, C)
    return dict(w_in=w_in, w_out=w_out, conv_w=conv_w, conv_b=conv_b,
                a_log=a_log, d=d, w_x=w_x, w_delta=w_delta, b_delta=b_delta)


# ---------------------------------------------------------------------------
# Pure-JAX reference (mirrors the PyTorch forward, f32 compute)
# ---------------------------------------------------------------------------
def ref_forward(x, p):
    B, L, Din = x.shape
    C = p['w_out'].shape[0]
    N = p['a_log'].shape[0]
    K = p['conv_w'].shape[0]
    R = p['w_delta'].shape[0]
    w_in = p['w_in'].astype(jnp.float32)
    w_x = p['w_x'].astype(jnp.float32)
    w_out = p['w_out'].astype(jnp.float32)

    xz = x @ w_in
    xp, res = xz[..., :C], xz[..., C:]

    x_pad = jnp.pad(xp, ((0, 0), (K - 1, 0), (0, 0)))
    acc = jnp.zeros((B, L, C), jnp.float32) + p['conv_b'][None]
    for k in range(K):
        acc = acc + p['conv_w'][k][None, None, :] * x_pad[:, k:k + L, :]
    xc = _silu(acc)

    dbc = xc @ w_x
    delta_r, Bm, Cm = dbc[..., :R], dbc[..., R:R + N], dbc[..., R + N:]
    delta = _softplus(delta_r @ p['w_delta'] + p['b_delta'])
    a_exp_cn = jnp.exp(p['a_log']).T                          # (C, N)
    A_full = jnp.exp(-delta[..., None] * a_exp_cn[None, None, :, :])
    dB = delta[..., None] * Bm[:, :, None, :] * xc[..., None]

    h = jnp.zeros((B, C, N), jnp.float32)
    hs = [h]
    for t in range(1, L):
        h = A_full[:, t] * h + dB[:, t]
        hs.append(h)
    hs = jnp.stack(hs, axis=1)                                # (B, L, C, N)
    y = jnp.sum(hs * Cm[:, :, None, :], axis=-1) + p['d'] * xc
    return (y * _silu(res)) @ w_out


if __name__ == "__main__":
    in_channels = 8          # -> C = 16, state = 16, rank = 1, K = 4
    batch, seq = 2, 8

    key = jax.random.PRNGKey(0)
    pkey, xkey = jax.random.split(key)
    params = init_params(pkey, in_channels=in_channels)
    x = jax.random.normal(xkey, (batch, seq, in_channels), jnp.float32)

    out = mamba_block_forward(x, params)
    out = jax.block_until_ready(out)

    ref = ref_forward(x, params)
    # bf16 matmul inputs vs. the f32 reference -> relaxed but meaningful tol.
    np.testing.assert_allclose(np.asarray(out), np.asarray(ref),
                               rtol=3e-2, atol=3e-2)
    print("KERNEL_OK")
</pallas_src>

<mosaic_0001>
module attributes {stable_mosaic.version = 11 : i64} {
  func.func @mamba_block_kernel(%arg0: i32, %arg1: i32, %arg2: memref<1x8x8xf32, #tpu.memory_space<vmem>>, %arg3: memref<8x32xbf16, #tpu.memory_space<vmem>>, %arg4: memref<4x16xf32, #tpu.memory_space<vmem>>, %arg5: memref<1x16xf32, #tpu.memory_space<vmem>>, %arg6: memref<16x33xbf16, #tpu.memory_space<vmem>>, %arg7: memref<1x16xf32, #tpu.memory_space<vmem>>, %arg8: memref<1x16xf32, #tpu.memory_space<vmem>>, %arg9: memref<16x16xf32, #tpu.memory_space<vmem>>, %arg10: memref<1x16xf32, #tpu.memory_space<vmem>>, %arg11: memref<16x8xbf16, #tpu.memory_space<vmem>>, %arg12: memref<1x8x8xf32, #tpu.memory_space<vmem>>, %arg13: memref<16x16xf32, #tpu.memory_space<vmem>>, %arg14: memref<16x16xf32, #tpu.memory_space<vmem>>, %arg15: memref<8x16x16xf32, #tpu.memory_space<vmem>>, %arg16: memref<8x16x16xf32, #tpu.memory_space<vmem>>, %arg17: memref<8x16x1xf32, #tpu.memory_space<vmem>>, %arg18: memref<8x16xf32, #tpu.memory_space<vmem>>) attributes {dimension_semantics = [#tpu.dimension_semantics<parallel>, #tpu.dimension_semantics<arbitrary>], iteration_bounds = array<i64: 2, 1>, scalar_prefetch = 0 : i64, scratch_operands = 6 : i64, tpu.core_type = #tpu.core_type<tc>, window_params = [{transform_indices = @transform_0, window_bounds = array<i64: 1, 8, 8>}, {pipeline_mode = #tpu.pipeline_mode<synchronous>, transform_indices = @transform_1, window_bounds = array<i64: 8, 32>}, {pipeline_mode = #tpu.pipeline_mode<synchronous>, transform_indices = @transform_2, window_bounds = array<i64: 4, 16>}, {pipeline_mode = #tpu.pipeline_mode<synchronous>, transform_indices = @transform_3, window_bounds = array<i64: 1, 16>}, {pipeline_mode = #tpu.pipeline_mode<synchronous>, transform_indices = @transform_4, window_bounds = array<i64: 16, 33>}, {pipeline_mode = #tpu.pipeline_mode<synchronous>, transform_indices = @transform_5, window_bounds = array<i64: 1, 16>}, {pipeline_mode = #tpu.pipeline_mode<synchronous>, transform_indices = @transform_6, window_bounds = array<i64: 1, 16>}, {pipeline_mode = #tpu.pipeline_mode<synchronous>, transform_indices = @transform_7, window_bounds = array<i64: 16, 16>}, {pipeline_mode = #tpu.pipeline_mode<synchronous>, transform_indices = @transform_8, window_bounds = array<i64: 1, 16>}, {pipeline_mode = #tpu.pipeline_mode<synchronous>, transform_indices = @transform_9, window_bounds = array<i64: 16, 8>}, {transform_indices = @transform_10, window_bounds = array<i64: 1, 8, 8>}]} {
    %c0_i32 = arith.constant 0 : i32
    %0 = arith.cmpi eq, %arg1, %c0_i32 : i32
    %1 = arith.extui %0 : i1 to i32
    %c0_i32_0 = arith.constant 0 : i32
    %2 = arith.cmpi ne, %1, %c0_i32_0 : i32
    scf.if %2 {
      %cst_122 = arith.constant 0.000000e+00 : f32
      %237 = vector.broadcast %cst_122 : f32 to vector<16x16xf32>
      %c0_123 = arith.constant 0 : index
      %c0_124 = arith.constant 0 : index
      %238 = vector.load %arg13[%c0_123, %c0_124] : memref<16x16xf32, #tpu.memory_space<vmem>>, vector<16x16xf32>
      tpu.vector_store %arg13[%c0_123, %c0_124], %237 {strides = array<i32>} : memref<16x16xf32, #tpu.memory_space<vmem>>, vector<16x16xf32>,
      %cst_125 = arith.constant 0.000000e+00 : f32
      %239 = vector.broadcast %cst_125 : f32 to vector<8x16xf32>
      %c0_126 = arith.constant 0 : index
      %c0_127 = arith.constant 0 : index
      %240 = vector.load %arg14[%c0_126, %c0_127] : memref<16x16xf32, #tpu.memory_space<vmem>>, vector<8x16xf32>
      tpu.vector_store %arg14[%c0_126, %c0_127], %239 {strides = array<i32>} : memref<16x16xf32, #tpu.memory_space<vmem>>, vector<8x16xf32>,
    } else {
    }
    %c0 = arith.constant 0 : index
    %c0_1 = arith.constant 0 : index
    %c0_2 = arith.constant 0 : index
    %3 = vector.load %arg2[%c0, %c0_1, %c0_2] : memref<1x8x8xf32, #tpu.memory_space<vmem>>, vector<1x8x8xf32>
    %4 = vector.shape_cast %3 : vector<1x8x8xf32> to vector<8x8xf32>
    %5 = arith.truncf %4 : vector<8x8xf32> to vector<8x8xbf16>
    %c0_3 = arith.constant 0 : index
    %c0_4 = arith.constant 0 : index
    %6 = vector.load %arg3[%c0_3, %c0_4] : memref<8x32xbf16, #tpu.memory_space<vmem>>, vector<8x32xbf16>
    %cst = arith.constant dense<0.000000e+00> : vector<8x32xf32>
    %7 = tpu.matmul %5, %6, %cst {dimension_numbers = #tpu.dot_dimension_numbers<[1], [0], [0], [1], [0, 0, 1, 1], [], []>} : vector<8x8xbf16>, vector<8x32xbf16>, vector<8x32xf32> -> vector<8x32xf32>
    %8 = vector.extract_strided_slice %7 {offsets = [0, 0], sizes = [8, 16], strides = [1, 1]} : vector<8x32xf32> to vector<8x16xf32>
    %9 = vector.extract_strided_slice %7 {offsets = [0, 16], sizes = [8, 16], strides = [1, 1]} : vector<8x32xf32> to vector<8x16xf32>
    %c8 = arith.constant 8 : index
    %c0_5 = arith.constant 0 : index
    %10 = vector.load %arg14[%c8, %c0_5] : memref<16x16xf32, #tpu.memory_space<vmem>>, vector<8x16xf32>
    tpu.vector_store %arg14[%c8, %c0_5], %8 {strides = array<i32>} : memref<16x16xf32, #tpu.memory_space<vmem>>, vector<8x16xf32>,
    %c0_6 = arith.constant 0 : index
    %c0_7 = arith.constant 0 : index
    %11 = vector.load %arg5[%c0_6, %c0_7] : memref<1x16xf32, #tpu.memory_space<vmem>>, vector<1x16xf32>
    %c0_8 = arith.constant 0 : index
    %c0_9 = arith.constant 0 : index
    %12 = vector.load %arg4[%c0_8, %c0_9] : memref<4x16xf32, #tpu.memory_space<vmem>>, vector<1x16xf32>
    %c5 = arith.constant 5 : index
    %c0_10 = arith.constant 0 : index
    %13 = vector.load %arg14[%c5, %c0_10] : memref<16x16xf32, #tpu.memory_space<vmem>>, vector<8x16xf32>
    %14 = vector.broadcast %12 : vector<1x16xf32> to vector<8x16xf32>
    %15 = arith.mulf %14, %13 : vector<8x16xf32>
    %16 = vector.broadcast %11 : vector<1x16xf32> to vector<8x16xf32>
    %17 = arith.addf %16, %15 : vector<8x16xf32>
    %c1 = arith.constant 1 : index
    %c0_11 = arith.constant 0 : index
    %18 = vector.load %arg4[%c1, %c0_11] : memref<4x16xf32, #tpu.memory_space<vmem>>, vector<1x16xf32>
    %c6 = arith.constant 6 : index
    %c0_12 = arith.constant 0 : index
    %19 = vector.load %arg14[%c6, %c0_12] : memref<16x16xf32, #tpu.memory_space<vmem>>, vector<8x16xf32>
    %20 = vector.broadcast %18 : vector<1x16xf32> to vector<8x16xf32>
    %21 = arith.mulf %20, %19 : vector<8x16xf32>
    %22 = arith.addf %17, %21 : vector<8x16xf32>
    %c2 = arith.constant 2 : index
    %c0_13 = arith.constant 0 : index
    %23 = vector.load %arg4[%c2, %c0_13] : memref<4x16xf32, #tpu.memory_space<vmem>>, vector<1x16xf32>
    %c7 = arith.constant 7 : index
    %c0_14 = arith.constant 0 : index
    %24 = vector.load %arg14[%c7, %c0_14] : memref<16x16xf32, #tpu.memory_space<vmem>>, vector<8x16xf32>
    %25 = vector.broadcast %23 : vector<1x16xf32> to vector<8x16xf32>
    %26 = arith.mulf %25, %24 : vector<8x16xf32>
    %27 = arith.addf %22, %26 : vector<8x16xf32>
    %c3 = arith.constant 3 : index
    %c0_15 = arith.constant 0 : index
    %28 = vector.load %arg4[%c3, %c0_15] : memref<4x16xf32, #tpu.memory_space<vmem>>, vector<1x16xf32>
    %c8_16 = arith.constant 8 : index
    %c0_17 = arith.constant 0 : index
    %29 = vector.load %arg14[%c8_16, %c0_17] : memref<16x16xf32, #tpu.memory_space<vmem>>, vector<8x16xf32>
    %30 = vector.broadcast %28 : vector<1x16xf32> to vector<8x16xf32>
    %31 = arith.mulf %30, %29 : vector<8x16xf32>
    %32 = arith.addf %27, %31 : vector<8x16xf32>
    %33 = vector.extract_strided_slice %8 {offsets = [5, 0], sizes = [3, 16], strides = [1, 1]} : vector<8x16xf32> to vector<3x16xf32>
    %c5_18 = arith.constant 5 : index
    %c0_19 = arith.constant 0 : index
    %34 = vector.load %arg14[%c5_18, %c0_19] : memref<16x16xf32, #tpu.memory_space<vmem>>, vector<3x16xf32>
    tpu.vector_store %arg14[%c5_18, %c0_19], %33 {strides = array<i32>} : memref<16x16xf32, #tpu.memory_space<vmem>>, vector<3x16xf32>,
    %35 = arith.negf %32 : vector<8x16xf32>
    %36 = math.exp %35 : vector<8x16xf32>
    %cst_20 = arith.constant 1.000000e+00 : f32
    %37 = vector.broadcast %cst_20 : f32 to vector<8x16xf32>
    %38 = arith.addf %37, %36 : vector<8x16xf32>
    %39 = arith.divf %37, %38 : vector<8x16xf32>
    %40 = arith.mulf %32, %39 : vector<8x16xf32>
    %41 = arith.truncf %40 : vector<8x16xf32> to vector<8x16xbf16>
    %c0_21 = arith.constant 0 : index
    %c0_22 = arith.constant 0 : index
    %42 = vector.load %arg6[%c0_21, %c0_22] : memref<16x33xbf16, #tpu.memory_space<vmem>>, vector<16x33xbf16>
    %cst_23 = arith.constant dense<0.000000e+00> : vector<8x33xf32>
    %43 = tpu.matmul %41, %42, %cst_23 {dimension_numbers = #tpu.dot_dimension_numbers<[1], [0], [0], [1], [0, 0, 1, 1], [], []>} : vector<8x16xbf16>, vector<16x33xbf16>, vector<8x33xf32> -> vector<8x33xf32>
    %44 = vector.extract_strided_slice %43 {offsets = [0, 0], sizes = [8, 1], strides = [1, 1]} : vector<8x33xf32> to vector<8x1xf32>
    %45 = vector.extract_strided_slice %43 {offsets = [0, 1], sizes = [8, 16], strides = [1, 1]} : vector<8x33xf32> to vector<8x16xf32>
    %46 = vector.extract_strided_slice %43 {offsets = [0, 17], sizes = [8, 16], strides = [1, 1]} : vector<8x33xf32> to vector<8x16xf32>
    %c0_24 = arith.constant 0 : index
    %c0_25 = arith.constant 0 : index
    %47 = vector.load %arg7[%c0_24, %c0_25] : memref<1x16xf32, #tpu.memory_space<vmem>>, vector<1x16xf32>
    %48 = vector.broadcast %44 : vector<8x1xf32> to vector<8x16xf32>
    %49 = vector.broadcast %47 : vector<1x16xf32> to vector<8x16xf32>
    %50 = arith.mulf %48, %49 : vector<8x16xf32>
    %c0_26 = arith.constant 0 : index
    %c0_27 = arith.constant 0 : index
    %51 = vector.load %arg8[%c0_26, %c0_27] : memref<1x16xf32, #tpu.memory_space<vmem>>, vector<1x16xf32>
    %52 = vector.broadcast %51 : vector<1x16xf32> to vector<8x16xf32>
    %53 = arith.addf %50, %52 : vector<8x16xf32>
    %cst_28 = arith.constant 2.000000e+01 : f32
    %54 = vector.broadcast %cst_28 : f32 to vector<8x16xf32>
    %55 = arith.cmpf ogt, %53, %54 : vector<8x16xf32>
    %56 = math.exp %53 : vector<8x16xf32>
    %57 = math.log1p %56 : vector<8x16xf32>
    %58 = arith.select %55, %53, %57 : vector<8x16xi1>, vector<8x16xf32>
    %c0_29 = arith.constant 0 : index
    %c0_30 = arith.constant 0 : index
    %59 = vector.load %arg9[%c0_29, %c0_30] : memref<16x16xf32, #tpu.memory_space<vmem>>, vector<16x16xf32>
    %60 = math.exp %59 : vector<16x16xf32>
    %61 = vector.shape_cast %58 : vector<8x16xf32> to vector<8x1x16xf32>
    %cst_31 = arith.constant 0.000000e+00 : f32
    %62 = vector.broadcast %cst_31 : f32 to vector<8x1x16xf32>
    %63 = arith.subf %62, %61 : vector<8x1x16xf32>
    %64 = vector.shape_cast %60 : vector<16x16xf32> to vector<1x16x16xf32>
    %65 = vector.broadcast %63 : vector<8x1x16xf32> to vector<8x16x16xf32>
    %66 = vector.broadcast %64 : vector<1x16x16xf32> to vector<8x16x16xf32>
    %67 = arith.mulf %65, %66 : vector<8x16x16xf32>
    %68 = math.exp %67 : vector<8x16x16xf32>
    %c0_32 = arith.constant 0 : index
    %c0_33 = arith.constant 0 : index
    %c0_34 = arith.constant 0 : index
    %69 = vector.load %arg15[%c0_32, %c0_33, %c0_34] : memref<8x16x16xf32, #tpu.memory_space<vmem>>, vector<8x16x16xf32>
    tpu.vector_store %arg15[%c0_32, %c0_33, %c0_34], %68 {strides = array<i32>} : memref<8x16x16xf32, #tpu.memory_space<vmem>>, vector<8x16x16xf32>,
    %70 = arith.mulf %58, %40 : vector<8x16xf32>
    %71 = vector.shape_cast %70 : vector<8x16xf32> to vector<8x1x16xf32>
    %72 = vector.shape_cast %45 : vector<8x16xf32> to vector<8x16x1xf32>
    %73 = vector.broadcast %71 : vector<8x1x16xf32> to vector<8x16x16xf32>
    %74 = vector.broadcast %72 : vector<8x16x1xf32> to vector<8x16x16xf32>
    %75 = arith.mulf %73, %74 : vector<8x16x16xf32>
    %c0_35 = arith.constant 0 : index
    %c0_36 = arith.constant 0 : index
    %c0_37 = arith.constant 0 : index
    %76 = vector.load %arg16[%c0_35, %c0_36, %c0_37] : memref<8x16x16xf32, #tpu.memory_space<vmem>>, vector<8x16x16xf32>
    tpu.vector_store %arg16[%c0_35, %c0_36, %c0_37], %75 {strides = array<i32>} : memref<8x16x16xf32, #tpu.memory_space<vmem>>, vector<8x16x16xf32>,
    %77 = vector.shape_cast %46 : vector<8x16xf32> to vector<8x16x1xf32>
    %c0_38 = arith.constant 0 : index
    %c0_39 = arith.constant 0 : index
    %c0_40 = arith.constant 0 : index
    %78 = vector.load %arg17[%c0_38, %c0_39, %c0_40] : memref<8x16x1xf32, #tpu.memory_space<vmem>>, vector<8x16x1xf32>
    tpu.vector_store %arg17[%c0_38, %c0_39, %c0_40], %77 {strides = array<i32>} : memref<8x16x1xf32, #tpu.memory_space<vmem>>, vector<8x16x1xf32>,
    %79 = arith.extui %0 : i1 to i32
    %c0_i32_41 = arith.constant 0 : i32
    %80 = arith.cmpi ne, %79, %c0_i32_41 : i32
    scf.if %80 {
      %cst_122 = arith.constant 0.000000e+00 : f32
      %237 = vector.broadcast %cst_122 : f32 to vector<16x16xf32>
      %c0_123 = arith.constant 0 : index
      %c0_124 = arith.constant 0 : index
      %c0_125 = arith.constant 0 : index
      %238 = vector.load %arg16[%c0_123, %c0_124, %c0_125] : memref<8x16x16xf32, #tpu.memory_space<vmem>>, vector<1x16x16xf32>
      %239 = vector.shape_cast %238 : vector<1x16x16xf32> to vector<16x16xf32>
      %240 = vector.shape_cast %237 : vector<16x16xf32> to vector<1x16x16xf32>
      tpu.vector_store %arg16[%c0_123, %c0_124, %c0_125], %240 {strides = array<i32>} : memref<8x16x16xf32, #tpu.memory_space<vmem>>, vector<1x16x16xf32>,
    } else {
    }
    %c0_42 = arith.constant 0 : index
    %c0_43 = arith.constant 0 : index
    %81 = vector.load %arg13[%c0_42, %c0_43] : memref<16x16xf32, #tpu.memory_space<vmem>>, vector<16x16xf32>
    %c0_i32_44 = arith.constant 0 : i32
    %82 = arith.index_cast %c0_i32_44 : i32 to index
    %c0_45 = arith.constant 0 : index
    %c0_46 = arith.constant 0 : index
    %83 = vector.load %arg15[%82, %c0_45, %c0_46] : memref<8x16x16xf32, #tpu.memory_space<vmem>>, vector<1x16x16xf32>
    %84 = vector.shape_cast %83 : vector<1x16x16xf32> to vector<16x16xf32>
    %85 = arith.mulf %84, %81 : vector<16x16xf32>
    %86 = arith.index_cast %c0_i32_44 : i32 to index
    %c0_47 = arith.constant 0 : index
    %c0_48 = arith.constant 0 : index
    %87 = vector.load %arg16[%86, %c0_47, %c0_48] : memref<8x16x16xf32, #tpu.memory_space<vmem>>, vector<1x16x16xf32>
    %88 = vector.shape_cast %87 : vector<1x16x16xf32> to vector<16x16xf32>
    %89 = arith.addf %85, %88 : vector<16x16xf32>
    %90 = arith.index_cast %c0_i32_44 : i32 to index
    %c0_49 = arith.constant 0 : index
    %c0_50 = arith.constant 0 : index
    %91 = vector.load %arg17[%90, %c0_49, %c0_50] : memref<8x16x1xf32, #tpu.memory_space<vmem>>, vector<1x16x1xf32>
    %92 = vector.shape_cast %91 : vector<1x16x1xf32> to vector<16x1xf32>
    %93 = vector.broadcast %92 : vector<16x1xf32> to vector<16x16xf32>
    %94 = arith.mulf %89, %93 : vector<16x16xf32>
    %cst_51 = arith.constant dense<0.000000e+00> : vector<16xf32>
    %95 = vector.multi_reduction <add>, %94, %cst_51 [0] : vector<16x16xf32> to vector<16xf32>
    %96 = vector.shape_cast %95 : vector<16xf32> to vector<1x16xf32>
    %97 = arith.index_cast %c0_i32_44 : i32 to index
    %c0_52 = arith.constant 0 : index
    %98 = vector.load %arg18[%97, %c0_52] : memref<8x16xf32, #tpu.memory_space<vmem>>, vector<1x16xf32>
    tpu.vector_store %arg18[%97, %c0_52], %96 {strides = array<i32>} : memref<8x16xf32, #tpu.memory_space<vmem>>, vector<1x16xf32>,
    %c1_i32 = arith.constant 1 : i32
    %99 = arith.index_cast %c1_i32 : i32 to index
    %c0_53 = arith.constant 0 : index
    %c0_54 = arith.constant 0 : index
    %100 = vector.load %arg15[%99, %c0_53, %c0_54] : memref<8x16x16xf32, #tpu.memory_space<vmem>>, vector<1x16x16xf32>
    %101 = vector.shape_cast %100 : vector<1x16x16xf32> to vector<16x16xf32>
    %102 = arith.mulf %101, %89 : vector<16x16xf32>
    %103 = arith.index_cast %c1_i32 : i32 to index
    %c0_55 = arith.constant 0 : index
    %c0_56 = arith.constant 0 : index
    %104 = vector.load %arg16[%103, %c0_55, %c0_56] : memref<8x16x16xf32, #tpu.memory_space<vmem>>, vector<1x16x16xf32>
    %105 = vector.shape_cast %104 : vector<1x16x16xf32> to vector<16x16xf32>
    %106 = arith.addf %102, %105 : vector<16x16xf32>
    %107 = arith.index_cast %c1_i32 : i32 to index
    %c0_57 = arith.constant 0 : index
    %c0_58 = arith.constant 0 : index
    %108 = vector.load %arg17[%107, %c0_57, %c0_58] : memref<8x16x1xf32, #tpu.memory_space<vmem>>, vector<1x16x1xf32>
    %109 = vector.shape_cast %108 : vector<1x16x1xf32> to vector<16x1xf32>
    %110 = vector.broadcast %109 : vector<16x1xf32> to vector<16x16xf32>
    %111 = arith.mulf %106, %110 : vector<16x16xf32>
    %cst_59 = arith.constant dense<0.000000e+00> : vector<16xf32>
    %112 = vector.multi_reduction <add>, %111, %cst_59 [0] : vector<16x16xf32> to vector<16xf32>
    %113 = vector.shape_cast %112 : vector<16xf32> to vector<1x16xf32>
    %114 = arith.index_cast %c1_i32 : i32 to index
    %c0_60 = arith.constant 0 : index
    %115 = vector.load %arg18[%114, %c0_60] : memref<8x16xf32, #tpu.memory_space<vmem>>, vector<1x16xf32>
    tpu.vector_store %arg18[%114, %c0_60], %113 {strides = array<i32>} : memref<8x16xf32, #tpu.memory_space<vmem>>, vector<1x16xf32>,
    %c2_i32 = arith.constant 2 : i32
    %116 = arith.index_cast %c2_i32 : i32 to index
    %c0_61 = arith.constant 0 : index
    %c0_62 = arith.constant 0 : index
    %117 = vector.load %arg15[%116, %c0_61, %c0_62] : memref<8x16x16xf32, #tpu.memory_space<vmem>>, vector<1x16x16xf32>
    %118 = vector.shape_cast %117 : vector<1x16x16xf32> to vector<16x16xf32>
    %119 = arith.mulf %118, %106 : vector<16x16xf32>
    %120 = arith.index_cast %c2_i32 : i32 to index
    %c0_63 = arith.constant 0 : index
    %c0_64 = arith.constant 0 : index
    %121 = vector.load %arg16[%120, %c0_63, %c0_64] : memref<8x16x16xf32, #tpu.memory_space<vmem>>, vector<1x16x16xf32>
    %122 = vector.shape_cast %121 : vector<1x16x16xf32> to vector<16x16xf32>
    %123 = arith.addf %119, %122 : vector<16x16xf32>
    %124 = arith.index_cast %c2_i32 : i32 to index
    %c0_65 = arith.constant 0 : index
    %c0_66 = arith.constant 0 : index
    %125 = vector.load %arg17[%124, %c0_65, %c0_66] : memref<8x16x1xf32, #tpu.memory_space<vmem>>, vector<1x16x1xf32>
    %126 = vector.shape_cast %125 : vector<1x16x1xf32> to vector<16x1xf32>
    %127 = vector.broadcast %126 : vector<16x1xf32> to vector<16x16xf32>
    %128 = arith.mulf %123, %127 : vector<16x16xf32>
    %cst_67 = arith.constant dense<0.000000e+00> : vector<16xf32>
    %129 = vector.multi_reduction <add>, %128, %cst_67 [0] : vector<16x16xf32> to vector<16xf32>
    %130 = vector.shape_cast %129 : vector<16xf32> to vector<1x16xf32>
    %131 = arith.index_cast %c2_i32 : i32 to index
    %c0_68 = arith.constant 0 : index
    %132 = vector.load %arg18[%131, %c0_68] : memref<8x16xf32, #tpu.memory_space<vmem>>, vector<1x16xf32>
    tpu.vector_store %arg18[%131, %c0_68], %130 {strides = array<i32>} : memref<8x16xf32, #tpu.memory_space<vmem>>, vector<1x16xf32>,
    %c3_i32 = arith.constant 3 : i32
    %133 = arith.index_cast %c3_i32 : i32 to index
    %c0_69 = arith.constant 0 : index
    %c0_70 = arith.constant 0 : index
    %134 = vector.load %arg15[%133, %c0_69, %c0_70] : memref<8x16x16xf32, #tpu.memory_space<vmem>>, vector<1x16x16xf32>
    %135 = vector.shape_cast %134 : vector<1x16x16xf32> to vector<16x16xf32>
    %136 = arith.mulf %135, %123 : vector<16x16xf32>
    %137 = arith.index_cast %c3_i32 : i32 to index
    %c0_71 = arith.constant 0 : index
    %c0_72 = arith.constant 0 : index
    %138 = vector.load %arg16[%137, %c0_71, %c0_72] : memref<8x16x16xf32, #tpu.memory_space<vmem>>, vector<1x16x16xf32>
    %139 = vector.shape_cast %138 : vector<1x16x16xf32> to vector<16x16xf32>
    %140 = arith.addf %136, %139 : vector<16x16xf32>
    %141 = arith.index_cast %c3_i32 : i32 to index
    %c0_73 = arith.constant 0 : index
    %c0_74 = arith.constant 0 : index
    %142 = vector.load %arg17[%141, %c0_73, %c0_74] : memref<8x16x1xf32, #tpu.memory_space<vmem>>, vector<1x16x1xf32>
    %143 = vector.shape_cast %142 : vector<1x16x1xf32> to vector<16x1xf32>
    %144 = vector.broadcast %143 : vector<16x1xf32> to vector<16x16xf32>
    %145 = arith.mulf %140, %144 : vector<16x16xf32>
    %cst_75 = arith.constant dense<0.000000e+00> : vector<16xf32>
    %146 = vector.multi_reduction <add>, %145, %cst_75 [0] : vector<16x16xf32> to vector<16xf32>
    %147 = vector.shape_cast %146 : vector<16xf32> to vector<1x16xf32>
    %148 = arith.index_cast %c3_i32 : i32 to index
    %c0_76 = arith.constant 0 : index
    %149 = vector.load %arg18[%148, %c0_76] : memref<8x16xf32, #tpu.memory_space<vmem>>, vector<1x16xf32>
    tpu.vector_store %arg18[%148, %c0_76], %147 {strides = array<i32>} : memref<8x16xf32, #tpu.memory_space<vmem>>, vector<1x16xf32>,
    %c4_i32 = arith.constant 4 : i32
    %150 = arith.index_cast %c4_i32 : i32 to index
    %c0_77 = arith.constant 0 : index
    %c0_78 = arith.constant 0 : index
    %151 = vector.load %arg15[%150, %c0_77, %c0_78] : memref<8x16x16xf32, #tpu.memory_space<vmem>>, vector<1x16x16xf32>
    %152 = vector.shape_cast %151 : vector<1x16x16xf32> to vector<16x16xf32>
    %153 = arith.mulf %152, %140 : vector<16x16xf32>
    %154 = arith.index_cast %c4_i32 : i32 to index
    %c0_79 = arith.constant 0 : index
    %c0_80 = arith.constant 0 : index
    %155 = vector.load %arg16[%154, %c0_79, %c0_80] : memref<8x16x16xf32, #tpu.memory_space<vmem>>, vector<1x16x16xf32>
    %156 = vector.shape_cast %155 : vector<1x16x16xf32> to vector<16x16xf32>
    %157 = arith.addf %153, %156 : vector<16x16xf32>
    %158 = arith.index_cast %c4_i32 : i32 to index
    %c0_81 = arith.constant 0 : index
    %c0_82 = arith.constant 0 : index
    %159 = vector.load %arg17[%158, %c0_81, %c0_82] : memref<8x16x1xf32, #tpu.memory_space<vmem>>, vector<1x16x1xf32>
    %160 = vector.shape_cast %159 : vector<1x16x1xf32> to vector<16x1xf32>
    %161 = vector.broadcast %160 : vector<16x1xf32> to vector<16x16xf32>
    %162 = arith.mulf %157, %161 : vector<16x16xf32>
    %cst_83 = arith.constant dense<0.000000e+00> : vector<16xf32>
    %163 = vector.multi_reduction <add>, %162, %cst_83 [0] : vector<16x16xf32> to vector<16xf32>
    %164 = vector.shape_cast %163 : vector<16xf32> to vector<1x16xf32>
    %165 = arith.index_cast %c4_i32 : i32 to index
    %c0_84 = arith.constant 0 : index
    %166 = vector.load %arg18[%165, %c0_84] : memref<8x16xf32, #tpu.memory_space<vmem>>, vector<1x16xf32>
    tpu.vector_store %arg18[%165, %c0_84], %164 {strides = array<i32>} : memref<8x16xf32, #tpu.memory_space<vmem>>, vector<1x16xf32>,
    %c5_i32 = arith.constant 5 : i32
    %167 = arith.index_cast %c5_i32 : i32 to index
    %c0_85 = arith.constant 0 : index
    %c0_86 = arith.constant 0 : index
    %168 = vector.load %arg15[%167, %c0_85, %c0_86] : memref<8x16x16xf32, #tpu.memory_space<vmem>>, vector<1x16x16xf32>
    %169 = vector.shape_cast %168 : vector<1x16x16xf32> to vector<16x16xf32>
    %170 = arith.mulf %169, %157 : vector<16x16xf32>
    %171 = arith.index_cast %c5_i32 : i32 to index
    %c0_87 = arith.constant 0 : index
    %c0_88 = arith.constant 0 : index
    %172 = vector.load %arg16[%171, %c0_87, %c0_88] : memref<8x16x16xf32, #tpu.memory_space<vmem>>, vector<1x16x16xf32>
    %173 = vector.shape_cast %172 : vector<1x16x16xf32> to vector<16x16xf32>
    %174 = arith.addf %170, %173 : vector<16x16xf32>
    %175 = arith.index_cast %c5_i32 : i32 to index
    %c0_89 = arith.constant 0 : index
    %c0_90 = arith.constant 0 : index
    %176 = vector.load %arg17[%175, %c0_89, %c0_90] : memref<8x16x1xf32, #tpu.memory_space<vmem>>, vector<1x16x1xf32>
    %177 = vector.shape_cast %176 : vector<1x16x1xf32> to vector<16x1xf32>
    %178 = vector.broadcast %177 : vector<16x1xf32> to vector<16x16xf32>
    %179 = arith.mulf %174, %178 : vector<16x16xf32>
    %cst_91 = arith.constant dense<0.000000e+00> : vector<16xf32>
    %180 = vector.multi_reduction <add>, %179, %cst_91 [0] : vector<16x16xf32> to vector<16xf32>
    %181 = vector.shape_cast %180 : vector<16xf32> to vector<1x16xf32>
    %182 = arith.index_cast %c5_i32 : i32 to index
    %c0_92 = arith.constant 0 : index
    %183 = vector.load %arg18[%182, %c0_92] : memref<8x16xf32, #tpu.memory_space<vmem>>, vector<1x16xf32>
    tpu.vector_store %arg18[%182, %c0_92], %181 {strides = array<i32>} : memref<8x16xf32, #tpu.memory_space<vmem>>, vector<1x16xf32>,
    %c6_i32 = arith.constant 6 : i32
    %184 = arith.index_cast %c6_i32 : i32 to index
    %c0_93 = arith.constant 0 : index
    %c0_94 = arith.constant 0 : index
    %185 = vector.load %arg15[%184, %c0_93, %c0_94] : memref<8x16x16xf32, #tpu.memory_space<vmem>>, vector<1x16x16xf32>
    %186 = vector.shape_cast %185 : vector<1x16x16xf32> to vector<16x16xf32>
    %187 = arith.mulf %186, %174 : vector<16x16xf32>
    %188 = arith.index_cast %c6_i32 : i32 to index
    %c0_95 = arith.constant 0 : index
    %c0_96 = arith.constant 0 : index
    %189 = vector.load %arg16[%188, %c0_95, %c0_96] : memref<8x16x16xf32, #tpu.memory_space<vmem>>, vector<1x16x16xf32>
    %190 = vector.shape_cast %189 : vector<1x16x16xf32> to vector<16x16xf32>
    %191 = arith.addf %187, %190 : vector<16x16xf32>
    %192 = arith.index_cast %c6_i32 : i32 to index
    %c0_97 = arith.constant 0 : index
    %c0_98 = arith.constant 0 : index
    %193 = vector.load %arg17[%192, %c0_97, %c0_98] : memref<8x16x1xf32, #tpu.memory_space<vmem>>, vector<1x16x1xf32>
    %194 = vector.shape_cast %193 : vector<1x16x1xf32> to vector<16x1xf32>
    %195 = vector.broadcast %194 : vector<16x1xf32> to vector<16x16xf32>
    %196 = arith.mulf %191, %195 : vector<16x16xf32>
    %cst_99 = arith.constant dense<0.000000e+00> : vector<16xf32>
    %197 = vector.multi_reduction <add>, %196, %cst_99 [0] : vector<16x16xf32> to vector<16xf32>
    %198 = vector.shape_cast %197 : vector<16xf32> to vector<1x16xf32>
    %199 = arith.index_cast %c6_i32 : i32 to index
    %c0_100 = arith.constant 0 : index
    %200 = vector.load %arg18[%199, %c0_100] : memref<8x16xf32, #tpu.memory_space<vmem>>, vector<1x16xf32>
    tpu.vector_store %arg18[%199, %c0_100], %198 {strides = array<i32>} : memref<8x16xf32, #tpu.memory_space<vmem>>, vector<1x16xf32>,
    %c7_i32 = arith.constant 7 : i32
    %201 = arith.index_cast %c7_i32 : i32 to index
    %c0_101 = arith.constant 0 : index
    %c0_102 = arith.constant 0 : index
    %202 = vector.load %arg15[%201, %c0_101, %c0_102] : memref<8x16x16xf32, #tpu.memory_space<vmem>>, vector<1x16x16xf32>
    %203 = vector.shape_cast %202 : vector<1x16x16xf32> to vector<16x16xf32>
    %204 = arith.mulf %203, %191 : vector<16x16xf32>
    %205 = arith.index_cast %c7_i32 : i32 to index
    %c0_103 = arith.constant 0 : index
    %c0_104 = arith.constant 0 : index
    %206 = vector.load %arg16[%205, %c0_103, %c0_104] : memref<8x16x16xf32, #tpu.memory_space<vmem>>, vector<1x16x16xf32>
    %207 = vector.shape_cast %206 : vector<1x16x16xf32> to vector<16x16xf32>
    %208 = arith.addf %204, %207 : vector<16x16xf32>
    %209 = arith.index_cast %c7_i32 : i32 to index
    %c0_105 = arith.constant 0 : index
    %c0_106 = arith.constant 0 : index
    %210 = vector.load %arg17[%209, %c0_105, %c0_106] : memref<8x16x1xf32, #tpu.memory_space<vmem>>, vector<1x16x1xf32>
    %211 = vector.shape_cast %210 : vector<1x16x1xf32> to vector<16x1xf32>
    %212 = vector.broadcast %211 : vector<16x1xf32> to vector<16x16xf32>
    %213 = arith.mulf %208, %212 : vector<16x16xf32>
    %cst_107 = arith.constant dense<0.000000e+00> : vector<16xf32>
    %214 = vector.multi_reduction <add>, %213, %cst_107 [0] : vector<16x16xf32> to vector<16xf32>
    %215 = vector.shape_cast %214 : vector<16xf32> to vector<1x16xf32>
    %216 = arith.index_cast %c7_i32 : i32 to index
    %c0_108 = arith.constant 0 : index
    %217 = vector.load %arg18[%216, %c0_108] : memref<8x16xf32, #tpu.memory_space<vmem>>, vector<1x16xf32>
    tpu.vector_store %arg18[%216, %c0_108], %215 {strides = array<i32>} : memref<8x16xf32, #tpu.memory_space<vmem>>, vector<1x16xf32>,
    %c8_i32 = arith.constant 8 : i32
    %c0_109 = arith.constant 0 : index
    %c0_110 = arith.constant 0 : index
    %218 = vector.load %arg13[%c0_109, %c0_110] : memref<16x16xf32, #tpu.memory_space<vmem>>, vector<16x16xf32>
    tpu.vector_store %arg13[%c0_109, %c0_110], %208 {strides = array<i32>} : memref<16x16xf32, #tpu.memory_space<vmem>>, vector<16x16xf32>,
    %c0_111 = arith.constant 0 : index
    %c0_112 = arith.constant 0 : index
    %219 = vector.load %arg18[%c0_111, %c0_112] : memref<8x16xf32, #tpu.memory_space<vmem>>, vector<8x16xf32>
    %c0_113 = arith.constant 0 : index
    %c0_114 = arith.constant 0 : index
    %220 = vector.load %arg10[%c0_113, %c0_114] : memref<1x16xf32, #tpu.memory_space<vmem>>, vector<1x16xf32>
    %221 = vector.broadcast %220 : vector<1x16xf32> to vector<8x16xf32>
    %222 = arith.mulf %221, %40 : vector<8x16xf32>
    %223 = arith.addf %219, %222 : vector<8x16xf32>
    %224 = arith.negf %9 : vector<8x16xf32>
    %225 = math.exp %224 : vector<8x16xf32>
    %cst_115 = arith.constant 1.000000e+00 : f32
    %226 = vector.broadcast %cst_115 : f32 to vector<8x16xf32>
    %227 = arith.addf %226, %225 : vector<8x16xf32>
    %228 = arith.divf %226, %227 : vector<8x16xf32>
    %229 = arith.mulf %9, %228 : vector<8x16xf32>
    %230 = arith.mulf %223, %229 : vector<8x16xf32>
    %231 = arith.truncf %230 : vector<8x16xf32> to vector<8x16xbf16>
    %c0_116 = arith.constant 0 : index
    %c0_117 = arith.constant 0 : index
    %232 = vector.load %arg11[%c0_116, %c0_117] : memref<16x8xbf16, #tpu.memory_space<vmem>>, vector<16x8xbf16>
    %cst_118 = arith.constant dense<0.000000e+00> : vector<8x8xf32>
    %233 = tpu.matmul %231, %232, %cst_118 {dimension_numbers = #tpu.dot_dimension_numbers<[1], [0], [0], [1], [0, 0, 1, 1], [], []>} : vector<8x16xbf16>, vector<16x8xbf16>, vector<8x8xf32> -> vector<8x8xf32>
    %c0_119 = arith.constant 0 : index
    %c0_120 = arith.constant 0 : index
    %c0_121 = arith.constant 0 : index
    %234 = vector.load %arg12[%c0_119, %c0_120, %c0_121] : memref<1x8x8xf32, #tpu.memory_space<vmem>>, vector<1x8x8xf32>
    %235 = vector.shape_cast %234 : vector<1x8x8xf32> to vector<8x8xf32>
    %236 = vector.shape_cast %233 : vector<8x8xf32> to vector<1x8x8xf32>
    tpu.vector_store %arg12[%c0_119, %c0_120, %c0_121], %236 {strides = array<i32>} : memref<1x8x8xf32, #tpu.memory_space<vmem>>, vector<1x8x8xf32>,
    return
  }
  func.func @transform_0(%arg0: i32, %arg1: i32) -> (i32, i32, i32) {
    %c0_i32 = arith.constant 0 : i32
    %c0_i32_0 = arith.constant 0 : i32
    return %arg0, %arg1, %c0_i32 : i32, i32, i32
  }
  func.func @transform_1(%arg0: i32, %arg1: i32) -> (i32, i32) {
    %c0_i32 = arith.constant 0 : i32
    %c0_i32_0 = arith.constant 0 : i32
    %c0_i32_1 = arith.constant 0 : i32
    return %c0_i32, %c0_i32_0 : i32, i32
  }
  func.func @transform_2(%arg0: i32, %arg1: i32) -> (i32, i32) {
    %c0_i32 = arith.constant 0 : i32
    %c0_i32_0 = arith.constant 0 : i32
    %c0_i32_1 = arith.constant 0 : i32
    return %c0_i32, %c0_i32_0 : i32, i32
  }
  func.func @transform_3(%arg0: i32, %arg1: i32) -> (i32, i32) {
    %c0_i32 = arith.constant 0 : i32
    %c0_i32_0 = arith.constant 0 : i32
    %c0_i32_1 = arith.constant 0 : i32
    return %c0_i32, %c0_i32_0 : i32, i32
  }
  func.func @transform_4(%arg0: i32, %arg1: i32) -> (i32, i32) {
    %c0_i32 = arith.constant 0 : i32
    %c0_i32_0 = arith.constant 0 : i32
    %c0_i32_1 = arith.constant 0 : i32
    return %c0_i32, %c0_i32_0 : i32, i32
  }
  func.func @transform_5(%arg0: i32, %arg1: i32) -> (i32, i32) {
    %c0_i32 = arith.constant 0 : i32
    %c0_i32_0 = arith.constant 0 : i32
    %c0_i32_1 = arith.constant 0 : i32
    return %c0_i32, %c0_i32_0 : i32, i32
  }
  func.func @transform_6(%arg0: i32, %arg1: i32) -> (i32, i32) {
    %c0_i32 = arith.constant 0 : i32
    %c0_i32_0 = arith.constant 0 : i32
    %c0_i32_1 = arith.constant 0 : i32
    return %c0_i32, %c0_i32_0 : i32, i32
  }
  func.func @transform_7(%arg0: i32, %arg1: i32) -> (i32, i32) {
    %c0_i32 = arith.constant 0 : i32
    %c0_i32_0 = arith.constant 0 : i32
    %c0_i32_1 = arith.constant 0 : i32
    return %c0_i32, %c0_i32_0 : i32, i32
  }
  func.func @transform_8(%arg0: i32, %arg1: i32) -> (i32, i32) {
    %c0_i32 = arith.constant 0 : i32
    %c0_i32_0 = arith.constant 0 : i32
    %c0_i32_1 = arith.constant 0 : i32
    return %c0_i32, %c0_i32_0 : i32, i32
  }
  func.func @transform_9(%arg0: i32, %arg1: i32) -> (i32, i32) {
    %c0_i32 = arith.constant 0 : i32
    %c0_i32_0 = arith.constant 0 : i32
    %c0_i32_1 = arith.constant 0 : i32
    return %c0_i32, %c0_i32_0 : i32, i32
  }
  func.func @transform_10(%arg0: i32, %arg1: i32) -> (i32, i32, i32) {
    %c0_i32 = arith.constant 0 : i32
    %c0_i32_0 = arith.constant 0 : i32
    return %arg0, %arg1, %c0_i32 : i32, i32, i32
  }
}

</mosaic_0001>

<llo_original>
// kernel: tpu_custom_call.1
$region0: #{tpu_custom_call.1}
  #allocation0 [shape = 'u32[]', space=smem, size = 0x4, offset = 0x4, fixed_abs, tag = 'smem constant byte address 0x4 - core index']
  #allocation1 [shape = 'u32[144,128]{1,0:T(1,128)}', space=vmem, size = 0x12000, scoped, tag = 'internal scratch']
  #allocation2 [shape = 'f32[16,16]{1,0:T(8,128)}', space=vmem, size = 0x2000, scoped, tag = 'scratch operand']
  #allocation3 [shape = 'f32[16,16]{1,0:T(8,128)}', space=vmem, size = 0x2000, scoped, tag = 'scratch operand']
  #allocation4 [shape = 'f32[8,16,16]{2,1,0:T(8,128)}', space=vmem, size = 0x10000, scoped, tag = 'scratch operand']
  #allocation5 [shape = 'f32[8,16,16]{2,1,0:T(8,128)}', space=vmem, size = 0x10000, scoped, tag = 'scratch operand']
  #allocation6 [shape = 'f32[8,16,1]{2,1,0:T(8,128)}', space=vmem, size = 0x10000, scoped, tag = 'scratch operand']
  #allocation7 [shape = 'f32[8,16]{1,0:T(8,128)}', space=vmem, size = 0x1000, scoped, tag = 'scratch operand']
  %s0 = inlined_call_operand.hbm [shape: f32[2,8,8], index: 0, kind: input, shape index: {}]
  %s1 = inlined_call_operand.vmem [shape: bf16[8,32], index: 1, kind: input, shape index: {}]
  %s2 = inlined_call_operand.hbm [shape: f32[4,16], index: 2, kind: input, shape index: {}]
  %s3 = inlined_call_operand.vmem [shape: f32[1,16], index: 3, kind: input, shape index: {}]
  %s4 = inlined_call_operand.vmem [shape: bf16[16,33], index: 4, kind: input, shape index: {}]
  %s5 = inlined_call_operand.vmem [shape: f32[1,16], index: 5, kind: input, shape index: {}]
  %s6 = inlined_call_operand.hbm [shape: f32[1,16], index: 6, kind: input, shape index: {}]
  %s7 = inlined_call_operand.vmem [shape: f32[16,16], index: 7, kind: input, shape index: {}]
  %s8 = inlined_call_operand.vmem [shape: f32[1,16], index: 8, kind: input, shape index: {}]
  %s9 = inlined_call_operand.vmem [shape: bf16[16,8], index: 9, kind: input, shape index: {}]
  %s10 = inlined_call_operand.hbm [shape: f32[2,8,8], index: 10, kind: output, shape index: {}]
  %s11 = sld [smem:[#allocation0]]
  $region93: #{tpu_custom_call.1} parent=0
    _
  %s13 = ssub.s32 1, %s11
  %s14 = scalar_select 0, %s13, %s11
  $region1: #{tpu_custom_call.1} parent=0
    #allocation8 [shape = 'u8[8192]{0}', space=vmem, size = 0x2000, scoped, tag = 'input window, operand 0']
    #allocation9 [shape = 's32[2]{0}', space=sflag, size = 0x8, scoped, tag = 'scoped memory for tpu_custom_call.1']
    #allocation10 [shape = 's32[2]{0}', space=sflag, size = 0x8, scoped, tag = 'scoped memory for tpu_custom_call.1']
    #allocation11 [shape = 'u8[2048]{0}', space=vmem, size = 0x800, scoped, tag = 'input window, operand 2, single buffered']
    #allocation12 [shape = 's32[1]{0}', space=sflag, size = 0x4, scoped, tag = 'scoped memory for tpu_custom_call.1']
    #allocation13 [shape = 'u8[512]{0}', space=vmem, size = 0x400, scoped, tag = 'input window, operand 6, single buffered']
    #allocation14 [shape = 'u8[8192]{0}', space=vmem, size = 0x2000, scoped, tag = 'output window, operand 0']
    %15 = vsyncpa [#allocation9], 0
    %s16 = scalar_lea.sflag [#allocation9], 1
    %17 = vsyncpa %s16, 0
    %18 = vsyncpa [#allocation12], 0
    %19 = vsyncpa [#allocation10], 0
    %s20 = scalar_lea.sflag [#allocation10], 1
    %21 = vsyncpa %s20, 0
    loop: start=0, step=1, limit=4
    $region2: #{tpu_custom_call.1} parent=1 // loop_pre_header
      _
    $region3: #{tpu_custom_call.1} parent=1 // loop_header
      %s23 = sphi 0, %s27
      %p24 = scmp.ge.s32.totalorder %s23, 4
      %s30 = sphi 0, %s42
      %s31 = sphi 0, %s38
      %s32 = sphi 0, %s30
      %s33 = sphi 0, %s31
      %s34 = sphi 0, %s32
      %s35 = sphi 0, %s33
      %s47 = sphi 0, %s49
      %s50 = sphi 0, %s47
      %s51 = sphi 0, %s50
      %s67 = sphi 0, %s51
      %s71 = sphi 0, %s71
      %s73 = sphi 0, %s71
      %s74 = sphi 0, %s73
      %s88 = sphi 0, %s74
      %s92 = sphi 0, %s92
      %s94 = sphi 0, %s92
      %s95 = sphi 0, %s94
      %s109 = sphi 0, %s95
      %s113 = sphi 0, %s113
      %s115 = sphi 0, %s113
      %s116 = sphi 0, %s115
      %s130 = sphi 0, %s116
      %s134 = sphi 0, %s134
      %s136 = sphi 0, %s134
      %s137 = sphi 0, %s136
      %s151 = sphi 0, %s137
      %s155 = sphi 0, %s155
      %s157 = sphi 0, %s155
      %s158 = sphi 0, %s157
      %s172 = sphi 0, %s158
      %s176 = sphi 0, %s176
      %s178 = sphi 0, %s176
      %s179 = sphi 0, %s178
      %s193 = sphi 0, %s179
      %s197 = sphi 0, %s197
      %s199 = sphi 0, %s197
      %s200 = sphi 0, %s199
      %s214 = sphi 0, %s200
      %s218 = sphi 0, %s218
      %s220 = sphi 0, %s218
      %s221 = sphi 0, %s220
      %s235 = sphi 0, %s221
      %s239 = sphi 0, %s239
      %s241 = sphi 0, %s239
      %s242 = sphi 0, %s241
      %s256 = sphi 0, %s242
      %s264 = sphi 0, %s266
      %s267 = sphi 0, %s264
      %s268 = sphi 0, %s267
      %s284 = sphi 0, %s268
    $region4: #{tpu_custom_call.1} parent=1 // loop_header_branch
      %26 = sbr.rel (%p24) target = $region8
    $region5: #{tpu_custom_call.1} parent=1 // loop_body
      %s28 = ssub.s32 %s23, 1
      %s29 = ssub.s32 %s23, 2
      %s36 = sadd.s32 1, %s31
      %p37 = scmp.ge.s32.totalorder %s36, 1
      %s38 = scalar_select %p37, 0, %s36
      %s39 = sadd.s32 1, %s30
      %s40 = scalar_select %p37, %s39, %s30
      %p41 = scmp.ge.s32.totalorder %s40, 2
      %s42 = scalar_select %p41, 0, %s40
      %s43 = ssub.s32 %s30, %s42
      %s44 = ssub.s32 %s31, %s38
      %s45 = sor.u32 %s43, %s44
      %p46 = scmp.eq.s32.totalorder %s45, 0
      %s48 = sadd.s32 %s47, 1
      %s49 = scalar_select %p46, %s47, %s48
      %p52 = pneg %p46
      %p53 = scmp.eq.s32.totalorder %s23, 1
      %p54 = por %p52, %p53
      %p55 = scmp.ne.s32.totalorder %s47, %s50
      %p56 = scmp.eq.s32.totalorder %s23, 0
      %p57 = por %p55, %p56
      %p58 = scmp.ne.s32.totalorder %s47, %s50
      %p59 = scmp.eq.s32.totalorder %s28, 1
      %p60 = por %p58, %p59
      %p61 = scmp.ne.s32.totalorder %s50, %s51
      %p62 = scmp.eq.s32.totalorder %s28, 0
      %p63 = por %p61, %p62
      %p64 = scmp.ne.s32.totalorder %s50, %s51
      %p65 = scmp.eq.s32.totalorder %s29, 1
      %p66 = por %p64, %p65
      %p68 = scmp.ne.s32.totalorder %s51, %s67
      %p69 = scmp.eq.s32.totalorder %s29, 0
      %p70 = por %p68, %p69
      %s72 = sadd.s32 %s71, 1
      %p75 = scmp.eq.s32.totalorder %s23, 1
      %p76 = scmp.ne.s32.totalorder %s71, %s73
      %p77 = scmp.eq.s32.totalorder %s23, 0
      %p78 = por %p76, %p77
      %p79 = scmp.ne.s32.totalorder %s71, %s73
      %p80 = scmp.eq.s32.totalorder %s28, 1
      %p81 = por %p79, %p80
      %p82 = scmp.ne.s32.totalorder %s73, %s74
      %p83 = scmp.eq.s32.totalorder %s28, 0
      %p84 = por %p82, %p83
      %p85 = scmp.ne.s32.totalorder %s73, %s74
      %p86 = scmp.eq.s32.totalorder %s29, 1
      %p87 = por %p85, %p86
      %p89 = scmp.ne.s32.totalorder %s74, %s88
      %p90 = scmp.eq.s32.totalorder %s29, 0
      %p91 = por %p89, %p90
      %s93 = sadd.s32 %s92, 1
      %p96 = scmp.eq.s32.totalorder %s23, 1
      %p97 = scmp.ne.s32.totalorder %s92, %s94
      %p98 = scmp.eq.s32.totalorder %s23, 0
      %p99 = por %p97, %p98
      %p100 = scmp.ne.s32.totalorder %s92, %s94
      %p101 = scmp.eq.s32.totalorder %s28, 1
      %p102 = por %p100, %p101
      %p103 = scmp.ne.s32.totalorder %s94, %s95
      %p104 = scmp.eq.s32.totalorder %s28, 0
      %p105 = por %p103, %p104
      %p106 = scmp.ne.s32.totalorder %s94, %s95
      %p107 = scmp.eq.s32.totalorder %s29, 1
      %p108 = por %p106, %p107
      %p110 = scmp.ne.s32.totalorder %s95, %s109
      %p111 = scmp.eq.s32.totalorder %s29, 0
      %p112 = por %p110, %p111
      %s114 = sadd.s32 %s113, 1
      %p117 = scmp.eq.s32.totalorder %s23, 1
      %p118 = scmp.ne.s32.totalorder %s113, %s115
      %p119 = scmp.eq.s32.totalorder %s23, 0
      %p120 = por %p118, %p119
      %p121 = scmp.ne.s32.totalorder %s113, %s115
      %p122 = scmp.eq.s32.totalorder %s28, 1
      %p123 = por %p121, %p122
      %p124 = scmp.ne.s32.totalorder %s115, %s116
      %p125 = scmp.eq.s32.totalorder %s28, 0
      %p126 = por %p124, %p125
      %p127 = scmp.ne.s32.totalorder %s115, %s116
      %p128 = scmp.eq.s32.totalorder %s29, 1
      %p129 = por %p127, %p128
      %p131 = scmp.ne.s32.totalorder %s116, %s130
      %p132 = scmp.eq.s32.totalorder %s29, 0
      %p133 = por %p131, %p132
      %s135 = sadd.s32 %s134, 1
      %p138 = scmp.eq.s32.totalorder %s23, 1
      %p139 = scmp.ne.s32.totalorder %s134, %s136
      %p140 = scmp.eq.s32.totalorder %s23, 0
      %p141 = por %p139, %p140
      %p142 = scmp.ne.s32.totalorder %s134, %s136
      %p143 = scmp.eq.s32.totalorder %s28, 1
      %p144 = por %p142, %p143
      %p145 = scmp.ne.s32.totalorder %s136, %s137
      %p146 = scmp.eq.s32.totalorder %s28, 0
      %p147 = por %p145, %p146
      %p148 = scmp.ne.s32.totalorder %s136, %s137
      %p149 = scmp.eq.s32.totalorder %s29, 1
      %p150 = por %p148, %p149
      %p152 = scmp.ne.s32.totalorder %s137, %s151
      %p153 = scmp.eq.s32.totalorder %s29, 0
      %p154 = por %p152, %p153
      %s156 = sadd.s32 %s155, 1
      %p159 = scmp.eq.s32.totalorder %s23, 1
      %p160 = scmp.ne.s32.totalorder %s155, %s157
      %p161 = scmp.eq.s32.totalorder %s23, 0
      %p162 = por %p160, %p161
      %p163 = scmp.ne.s32.totalorder %s155, %s157
      %p164 = scmp.eq.s32.totalorder %s28, 1
      %p165 = por %p163, %p164
      %p166 = scmp.ne.s32.totalorder %s157, %s158
      %p167 = scmp.eq.s32.totalorder %s28, 0
      %p168 = por %p166, %p167
      %p169 = scmp.ne.s32.totalorder %s157, %s158
      %p170 = scmp.eq.s32.totalorder %s29, 1
      %p171 = por %p169, %p170
      %p173 = scmp.ne.s32.totalorder %s158, %s172
      %p174 = scmp.eq.s32.totalorder %s29, 0
      %p175 = por %p173, %p174
      %s177 = sadd.s32 %s176, 1
      %p180 = scmp.eq.s32.totalorder %s23, 1
      %p181 = scmp.ne.s32.totalorder %s176, %s178
      %p182 = scmp.eq.s32.totalorder %s23, 0
      %p183 = por %p181, %p182
      %p184 = scmp.ne.s32.totalorder %s176, %s178
      %p185 = scmp.eq.s32.totalorder %s28, 1
      %p186 = por %p184, %p185
      %p187 = scmp.ne.s32.totalorder %s178, %s179
      %p188 = scmp.eq.s32.totalorder %s28, 0
      %p189 = por %p187, %p188
      %p190 = scmp.ne.s32.totalorder %s178, %s179
      %p191 = scmp.eq.s32.totalorder %s29, 1
      %p192 = por %p190, %p191
      %p194 = scmp.ne.s32.totalorder %s179, %s193
      %p195 = scmp.eq.s32.totalorder %s29, 0
      %p196 = por %p194, %p195
      %s198 = sadd.s32 %s197, 1
      %p201 = scmp.eq.s32.totalorder %s23, 1
      %p202 = scmp.ne.s32.totalorder %s197, %s199
      %p203 = scmp.eq.s32.totalorder %s23, 0
      %p204 = por %p202, %p203
      %p205 = scmp.ne.s32.totalorder %s197, %s199
      %p206 = scmp.eq.s32.totalorder %s28, 1
      %p207 = por %p205, %p206
      %p208 = scmp.ne.s32.totalorder %s199, %s200
      %p209 = scmp.eq.s32.totalorder %s28, 0
      %p210 = por %p208, %p209
      %p211 = scmp.ne.s32.totalorder %s199, %s200
      %p212 = scmp.eq.s32.totalorder %s29, 1
      %p213 = por %p211, %p212
      %p215 = scmp.ne.s32.totalorder %s200, %s214
      %p216 = scmp.eq.s32.totalorder %s29, 0
      %p217 = por %p215, %p216
      %s219 = sadd.s32 %s218, 1
      %p222 = scmp.eq.s32.totalorder %s23, 1
      %p223 = scmp.ne.s32.totalorder %s218, %s220
      %p224 = scmp.eq.s32.totalorder %s23, 0
      %p225 = por %p223, %p224
      %p226 = scmp.ne.s32.totalorder %s218, %s220
      %p227 = scmp.eq.s32.totalorder %s28, 1
      %p228 = por %p226, %p227
      %p229 = scmp.ne.s32.totalorder %s220, %s221
      %p230 = scmp.eq.s32.totalorder %s28, 0
      %p231 = por %p229, %p230
      %p232 = scmp.ne.s32.totalorder %s220, %s221
      %p233 = scmp.eq.s32.totalorder %s29, 1
      %p234 = por %p232, %p233
      %p236 = scmp.ne.s32.totalorder %s221, %s235
      %p237 = scmp.eq.s32.totalorder %s29, 0
      %p238 = por %p236, %p237
      %s240 = sadd.s32 %s239, 1
      %p243 = scmp.eq.s32.totalorder %s23, 1
      %p244 = scmp.ne.s32.totalorder %s239, %s241
      %p245 = scmp.eq.s32.totalorder %s23, 0
      %p246 = por %p244, %p245
      %p247 = scmp.ne.s32.totalorder %s239, %s241
      %p248 = scmp.eq.s32.totalorder %s28, 1
      %p249 = por %p247, %p248
      %p250 = scmp.ne.s32.totalorder %s241, %s242
      %p251 = scmp.eq.s32.totalorder %s28, 0
      %p252 = por %p250, %p251
      %p253 = scmp.ne.s32.totalorder %s241, %s242
      %p254 = scmp.eq.s32.totalorder %s29, 1
      %p255 = por %p253, %p254
      %p257 = scmp.ne.s32.totalorder %s242, %s256
      %p258 = scmp.eq.s32.totalorder %s29, 0
      %p259 = por %p257, %p258
      %s260 = ssub.s32 %s30, %s42
      %s261 = ssub.s32 %s31, %s38
      %s262 = sor.u32 %s260, %s261
      %p263 = scmp.eq.s32.totalorder %s262, 0
      %s265 = sadd.s32 %s264, 1
      %s266 = scalar_select %p263, %s264, %s265
      %p269 = pneg %p263
      %p270 = scmp.eq.s32.totalorder %s23, 1
      %p271 = por %p269, %p270
      %p272 = scmp.ne.s32.totalorder %s264, %s267
      %p273 = scmp.eq.s32.totalorder %s23, 0
      %p274 = por %p272, %p273
      %p275 = scmp.ne.s32.totalorder %s264, %s267
      %p276 = scmp.eq.s32.totalorder %s28, 1
      %p277 = por %p275, %p276
      %p278 = scmp.ne.s32.totalorder %s267, %s268
      %p279 = scmp.eq.s32.totalorder %s28, 0
      %p280 = por %p278, %p279
      %p281 = scmp.ne.s32.totalorder %s267, %s268
      %p282 = scmp.eq.s32.totalorder %s29, 1
      %p283 = por %p281, %p282
      %p285 = scmp.ne.s32.totalorder %s268, %s284
      %p286 = scmp.eq.s32.totalorder %s29, 0
      %p287 = por %p285, %p286
      %p288 = scmp.le.s32.totalorder 1, %s23
      %p289 = scmp.lt.s32.totalorder %s23, 3
      %p290 = pnand %p288, %p289
      %p291 = pneg %p290
      // Predicated region
      $region9: #{tpu_custom_call.1} parent=5 // pred_check
        _
      $region10: #{tpu_custom_call.1} parent=5 // pred_check_branch
        %293 = sbr.rel (%p290) target = $region12
      $region11: #{tpu_custom_call.1} parent=5 // pred_region
        %s294 = ssub.s32 %s23, 1
        // Predicated region
        $region13: #{tpu_custom_call.1} parent=11 // pred_check
          %p295 = pneg %p84
        $region14: #{tpu_custom_call.1} parent=11 // pred_check_branch
          %297 = sbr.rel (%p295) target = $region16
        $region15: #{tpu_custom_call.1} parent=11 // pred_region
          _
        $region16: #{tpu_custom_call.1} parent=11 // pred_fallthru
          _
        // Predicated region
        $region17: #{tpu_custom_call.1} parent=11 // pred_check
          %p298 = pneg %p105
        $region18: #{tpu_custom_call.1} parent=11 // pred_check_branch
          %300 = sbr.rel (%p298) target = $region20
        $region19: #{tpu_custom_call.1} parent=11 // pred_region
          %s302 = ssub.s32 64, 64
          %303 = vsyncadd [#allocation12], %s302
          %s305 = sshll.u32 [#allocation11], 4
          %s306 = int_to_ptr.vmem [resolvable:$true] %s305
          %308 = dma.hbm_to_vmem [thread:$0]  %s2, 64, %s306, [#allocation12]
        $region20: #{tpu_custom_call.1} parent=11 // pred_fallthru
          _
        // Predicated region
        $region21: #{tpu_custom_call.1} parent=11 // pred_check
          %p309 = pneg %p126
        $region22: #{tpu_custom_call.1} parent=11 // pred_check_branch
          %311 = sbr.rel (%p309) target = $region24
        $region23: #{tpu_custom_call.1} parent=11 // pred_region
          _
        $region24: #{tpu_custom_call.1} parent=11 // pred_fallthru
          _
        // Predicated region
        $region25: #{tpu_custom_call.1} parent=11 // pred_check
          %p312 = pneg %p147
        $region26: #{tpu_custom_call.1} parent=11 // pred_check_branch
          %314 = sbr.rel (%p312) target = $region28
        $region27: #{tpu_custom_call.1} parent=11 // pred_region
          _
        $region28: #{tpu_custom_call.1} parent=11 // pred_fallthru
          _
        // Predicated region
        $region29: #{tpu_custom_call.1} parent=11 // pred_check
          %p315 = pneg %p168
        $region30: #{tpu_custom_call.1} parent=11 // pred_check_branch
          %317 = sbr.rel (%p315) target = $region32
        $region31: #{tpu_custom_call.1} parent=11 // pred_region
          _
        $region32: #{tpu_custom_call.1} parent=11 // pred_fallthru
          _
        // Predicated region
        $region33: #{tpu_custom_call.1} parent=11 // pred_check
          %p318 = pneg %p189
        $region34: #{tpu_custom_call.1} parent=11 // pred_check_branch
          %320 = sbr.rel (%p318) target = $region36
        $region35: #{tpu_custom_call.1} parent=11 // pred_region
          %s322 = ssub.s32 16, 16
          %323 = vsyncadd [#allocation12], %s322
          %s325 = sshll.u32 [#allocation13], 4
          %s326 = int_to_ptr.vmem [resolvable:$true] %s325
          %328 = dma.hbm_to_vmem [thread:$0]  %s6, 16, %s326, [#allocation12]
        $region36: #{tpu_custom_call.1} parent=11 // pred_fallthru
          _
        // Predicated region
        $region37: #{tpu_custom_call.1} parent=11 // pred_check
          %p329 = pneg %p210
        $region38: #{tpu_custom_call.1} parent=11 // pred_check_branch
          %331 = sbr.rel (%p329) target = $region40
        $region39: #{tpu_custom_call.1} parent=11 // pred_region
          _
        $region40: #{tpu_custom_call.1} parent=11 // pred_fallthru
          _
        // Predicated region
        $region41: #{tpu_custom_call.1} parent=11 // pred_check
          %p332 = pneg %p231
        $region42: #{tpu_custom_call.1} parent=11 // pred_check_branch
          %334 = sbr.rel (%p332) target = $region44
        $region43: #{tpu_custom_call.1} parent=11 // pred_region
          _
        $region44: #{tpu_custom_call.1} parent=11 // pred_fallthru
          _
        // Predicated region
        $region45: #{tpu_custom_call.1} parent=11 // pred_check
          %p335 = pneg %p252
        $region46: #{tpu_custom_call.1} parent=11 // pred_check_branch
          %337 = sbr.rel (%p335) target = $region48
        $region47: #{tpu_custom_call.1} parent=11 // pred_region
          _
        $region48: #{tpu_custom_call.1} parent=11 // pred_fallthru
          _
      $region12: #{tpu_custom_call.1} parent=5 // pred_fallthru
        _
      %p338 = scmp.lt.s32.totalorder %s23, 2
      // Predicated region
      $region49: #{tpu_custom_call.1} parent=5 // pred_check
        %p339 = pneg %p338
      $region50: #{tpu_custom_call.1} parent=5 // pred_check_branch
        %341 = sbr.rel (%p339) target = $region52
      $region51: #{tpu_custom_call.1} parent=5 // pred_region
        // Predicated region
        $region53: #{tpu_custom_call.1} parent=51 // pred_check
          %p342 = pneg %p57
        $region54: #{tpu_custom_call.1} parent=51 // pred_check_branch
          %344 = sbr.rel (%p342) target = $region56
        $region55: #{tpu_custom_call.1} parent=51 // pred_region
          %s345 = sand.u32 %s47, 1
          %s346 = scalar_lea.sflag [#allocation9], %s345
          %s347 = sand.u32 %s47, 1
          %s348 = smul.addr %s347, 8
          %s349 = scalar_lea.vmem [#allocation8], %s348
          %s351 = ssub.s32 128, 128
          %352 = vsyncadd %s346, %s351
          %s353 = sadd.s32 %s31, %s30
          %s354 = smul.addr %s353, 128
          %s355 = scalar_lea.hbm %s0, %s354
          %s357 = sshll.u32 %s349, 4
          %s358 = int_to_ptr.vmem [resolvable:$true] %s357
          %360 = dma.hbm_to_vmem [thread:$0]  %s355, 128, %s358, %s346
        $region56: #{tpu_custom_call.1} parent=51 // pred_fallthru
          _
      $region52: #{tpu_custom_call.1} parent=5 // pred_fallthru
        _
      %p361 = scmp.le.s32.totalorder 1, %s23
      %p362 = scmp.lt.s32.totalorder %s23, 3
      %p363 = pnand %p361, %p362
      %p364 = pneg %p363
      // Predicated region
      $region57: #{tpu_custom_call.1} parent=5 // pred_check
        _
      $region58: #{tpu_custom_call.1} parent=5 // pred_check_branch
        %366 = sbr.rel (%p363) target = $region60
      $region59: #{tpu_custom_call.1} parent=5 // pred_region
        %s367 = ssub.s32 %s23, 1
        %s368 = sand.u32 %s50, 1
        %s369 = scalar_lea.sflag [#allocation9], %s368
        %s370 = sand.u32 %s50, 1
        %s371 = smul.addr %s370, 8
        %s372 = scalar_lea.vmem [#allocation8], %s371
        // Predicated region
        $region61: #{tpu_custom_call.1} parent=59 // pred_check
          %p373 = pneg %p63
        $region62: #{tpu_custom_call.1} parent=59 // pred_check_branch
          %375 = sbr.rel (%p373) target = $region64
        $region63: #{tpu_custom_call.1} parent=59 // pred_region
          %376 = dma.done %s369, 128
        $region64: #{tpu_custom_call.1} parent=59 // pred_fallthru
          _
        // Predicated region
        $region65: #{tpu_custom_call.1} parent=59 // pred_check
          %p377 = pneg %p105
        $region66: #{tpu_custom_call.1} parent=59 // pred_check_branch
          %379 = sbr.rel (%p377) target = $region68
        $region67: #{tpu_custom_call.1} parent=59 // pred_region
          %380 = dma.done [#allocation12], 64
        $region68: #{tpu_custom_call.1} parent=59 // pred_fallthru
          _
        // Predicated region
        $region69: #{tpu_custom_call.1} parent=59 // pred_check
          %p381 = pneg %p189
        $region70: #{tpu_custom_call.1} parent=59 // pred_check_branch
          %383 = sbr.rel (%p381) target = $region72
        $region71: #{tpu_custom_call.1} parent=59 // pred_region
          %384 = dma.done [#allocation12], 16
        $region72: #{tpu_custom_call.1} parent=59 // pred_fallthru
          _
        %s385 = sand.u32 %s50, 1
        %s386 = scalar_lea.sflag [#allocation9], %s385
        %s387 = sand.u32 %s50, 1
        %s388 = smul.addr %s387, 8
        %s389 = scalar_lea.vmem [#allocation8], %s388
        %p390 = pneg %p63
        %p391 = pneg %p60
        %p392 = pneg %p84
        %p393 = pneg %p81
        %p394 = pneg %p105
        %p395 = pneg %p102
        %p396 = pneg %p126
        %p397 = pneg %p123
        %p398 = pneg %p147
        %p399 = pneg %p144
        %p400 = pneg %p168
        %p401 = pneg %p165
        %p402 = pneg %p189
        %p403 = pneg %p186
        %p404 = pneg %p210
        %p405 = pneg %p207
        %p406 = pneg %p231
        %p407 = pneg %p228
        %p408 = pneg %p252
        %p409 = pneg %p249
        %p410 = pneg %p280
        %p411 = pneg %p277
        %s412 = sand.u32 %s267, 1
        %s413 = scalar_lea.sflag [#allocation10], %s412
        %s414 = sand.u32 %s267, 1
        %s415 = smul.addr %s414, 8
        %s416 = scalar_lea.vmem [#allocation14], %s415
        %p418 = scmp.eq.s32.totalorder %s33, 0
        // Predicated region
        $region73: #{tpu_custom_call.1} parent=59 // pred_check
          %p419 = pneg %p418
        $region74: #{tpu_custom_call.1} parent=59 // pred_check_branch
          %421 = sbr.rel (%p419) target = $region76
        $region75: #{tpu_custom_call.1} parent=59 // pred_region
          %vm422 = vcmask 130048
          %423 = vst.msk [vmem:[#allocation2] sm:$0xff] %vm422, 0.0
          %424 = vst.msk [vmem:[#allocation2 + $0x8] sm:$0xff] %vm422, 0.0
          %425 = vst.msk [vmem:[#allocation3] sm:$0xff] %vm422, 0.0
        $region76: #{tpu_custom_call.1} parent=59 // pred_fallthru
          _
        %v426 = vld [vmem:[%s372] sm:$0xff]
        %v427 = vpack.c.bf16 %v426, %v426
        %v428 = vld [vmem:[%s1] sm:$0xf]
        %vm429 = vcmask 64512
        %v431 = vsel %vm429, %v427, 0
        %vm433 = vcmask 1043456
        %v435 = vsel %vm433, %v428, 0
        %437 = vmatprep.subr.bf16.mxu0 0
        %438 = vmatpush1.bf16.msra.mxu0 %v435
        %439 = vmatprep.subr.bf16.mxu0 0
        %440 = vmatpush1.bf16.msra.mxu0 0
        %441 = vmatprep.subr.bf16.mxu0 0
        %442 = vmatpush1.bf16.msra.mxu0 0
        %443 = vmatprep.subr.bf16.mxu0 0
        %444 = vmatpush1.bf16.msra.mxu0 0
        %445 = vmatprep.subr.bf16.mxu0 0
        %446 = vmatpush1.bf16.msra.mxu0 0
        %447 = vmatprep.subr.bf16.mxu0 0
        %448 = vmatpush1.bf16.msra.mxu0 0
        %449 = vmatprep.subr.bf16.mxu0 0
        %450 = vmatpush1.bf16.msra.mxu0 0
        %451 = vmatprep.subr.bf16.mxu0 0
        %452 = vmatpush1.bf16.msra.mxu0 0
        %453 = vmatprep.subr.bf16.mxu0 0
        %454 = vmatpush1.bf16.msra.mxu0 0
        %455 = vmatprep.subr.bf16.mxu0 0
        %456 = vmatpush1.bf16.msra.mxu0 0
        %457 = vmatprep.subr.bf16.mxu0 0
        %458 = vmatpush1.bf16.msra.mxu0 0
        %459 = vmatprep.subr.bf16.mxu0 0
        %460 = vmatpush1.bf16.msra.mxu0 0
        %461 = vmatprep.subr.bf16.mxu0 0
        %462 = vmatpush1.bf16.msra.mxu0 0
        %463 = vmatprep.subr.bf16.mxu0 0
        %464 = vmatpush1.bf16.msra.mxu0 0
        %465 = vmatprep.subr.bf16.mxu0 0
        %466 = vmatpush1.bf16.msra.mxu0 0
        %467 = vmatprep.subr.bf16.mxu0 0
        %468 = vmatpush1.bf16.msra.mxu0 0
        %469 = vmatprep.mubr.bf16.mxu0 0
        %470 = vmatmul.mubr.bf16.gmra.mrb[0].mxu0 %v431
        %v471 = vpop.f32.mrb[0].mxu0
        %v472 = vadd.f32 0.0, %v471
        %v473 = vpop.f32.mrb[0].mxu0
        %v474 = vpop.f32.mrb[0].mxu0
        %v475 = vpop.f32.mrb[0].mxu0
        %476 = vdwg.mxu0
        %vm477 = vcmask 130048
        %478 = vst.msk [vmem:[#allocation3 + $0x8] sm:$0xff] %vm477, %v472
        %v479 = vld [vmem:[%s3] sm:$0x1]
        %v480 = vld [vmem:[#allocation11] sm:$0x1]
        %v481 = vld [vmem:[#allocation3 + $0x5] sm:$0xff]
        %v482 = vlaneseq
        %v483 = vshrl.u32 %v482, 7
        %v484 = vsub.s32 0, %v483
        %v485 = vrot.slane %v480, %v484
        %v486 = vmul.f32 %v485, %v481
        %v488 = vlaneseq
        %v489 = vshrl.u32 %v488, 7
        %v490 = vsub.s32 0, %v489
        %v491 = vrot.slane %v479, %v490
        %v493 = vadd.f32 %v491, %v486
        %v494 = vld [vmem:[#allocation11 + $0x1] sm:$0x1]
        %v495 = vld [vmem:[#allocation3 + $0x6] sm:$0xff]
        %v496 = vlaneseq
        %v497 = vshrl.u32 %v496, 7
        %v498 = vsub.s32 0, %v497
        %v499 = vrot.slane %v494, %v498
        %v500 = vmul.f32 %v499, %v495
        %v501 = vadd.f32 %v493, %v500
        %v502 = vld [vmem:[#allocation11 + $0x2] sm:$0x1]
        %v503 = vld [vmem:[#allocation3 + $0x7] sm:$0xff]
        %v504 = vlaneseq
        %v505 = vshrl.u32 %v504, 7
        %v506 = vsub.s32 0, %v505
        %v507 = vrot.slane %v502, %v506
        %v508 = vmul.f32 %v507, %v503
        %v509 = vadd.f32 %v501, %v508
        %v510 = vld [vmem:[#allocation11 + $0x3] sm:$0x1]
        %v511 = vld [vmem:[#allocation3 + $0x8] sm:$0xff]
        %v512 = vlaneseq
        %v513 = vshrl.u32 %v512, 7
        %v514 = vsub.s32 0, %v513
        %v515 = vrot.slane %v510, %v514
        %v516 = vmul.f32 %v515, %v511
        %v517 = vadd.f32 %v509, %v516
        %vm518 = vcmask 130053
        %519 = vst.msk [vmem:[#allocation3] sm:$0xe0] %vm518, %v472
        %v520 = vxor.u32 %v517, 2147483648
        %v521 = vmul.f32 %v520, 1.442695
        %v522 = vpow.pop %v521
        %v523 = vadd.f32 %v522, 1.0
        %v524 = vrcp.pop %v523
        %v525 = vmul.f32 1.0, %v524
        %v526 = vmul.f32 %v517, %v525
        %v527 = vpack.c.bf16 %v526, %v526
        %v528 = vld [vmem:[%s4] sm:$0xf]
        %v529 = vld [vmem:[%s4 + $0x4] sm:$0xf]
        %v532 = vunpack.c.l.b16 %v528
        %v533 = vunpack.c.l.b16 %v529
        %v534 = vpack.c.b16 %v533, %v532
        %v537 = vsel %vm477, %v527, 0
        %539 = vmatprep.subr.bf16.mxu0 0
        %540 = vmatpush1.bf16.msra.mxu0 %v534
        %541 = vmatprep.subr.bf16.mxu0 0
        %542 = vmatpush1.bf16.msra.mxu0 0
        %543 = vmatprep.subr.bf16.mxu0 0
        %544 = vmatpush1.bf16.msra.mxu0 0
        %545 = vmatprep.subr.bf16.mxu0 0
        %546 = vmatpush1.bf16.msra.mxu0 0
        %547 = vmatprep.subr.bf16.mxu0 0
        %548 = vmatpush1.bf16.msra.mxu0 0
        %549 = vmatprep.subr.bf16.mxu0 0
        %550 = vmatpush1.bf16.msra.mxu0 0
        %551 = vmatprep.subr.bf16.mxu0 0
        %552 = vmatpush1.bf16.msra.mxu0 0
        %553 = vmatprep.subr.bf16.mxu0 0
        %554 = vmatpush1.bf16.msra.mxu0 0
        %555 = vmatprep.subr.bf16.mxu0 0
        %556 = vmatpush1.bf16.msra.mxu0 0
        %557 = vmatprep.subr.bf16.mxu0 0
        %558 = vmatpush1.bf16.msra.mxu0 0
        %559 = vmatprep.subr.bf16.mxu0 0
        %560 = vmatpush1.bf16.msra.mxu0 0
        %561 = vmatprep.subr.bf16.mxu0 0
        %562 = vmatpush1.bf16.msra.mxu0 0
        %563 = vmatprep.subr.bf16.mxu0 0
        %564 = vmatpush1.bf16.msra.mxu0 0
        %565 = vmatprep.subr.bf16.mxu0 0
        %566 = vmatpush1.bf16.msra.mxu0 0
        %567 = vmatprep.subr.bf16.mxu0 0
        %568 = vmatpush1.bf16.msra.mxu0 0
        %569 = vmatprep.subr.bf16.mxu0 0
        %570 = vmatpush1.bf16.msra.mxu0 0
        %571 = vmatprep.mubr.bf16.mxu0 0
        %572 = vmatmul.mubr.bf16.gmra.mrb[0].mxu0 %v537
        %v573 = vpop.f32.mrb[0].mxu0
        %v574 = vadd.f32 0.0, %v573
        %v575 = vpop.f32.mrb[0].mxu0
        %v576 = vpop.f32.mrb[0].mxu0
        %v577 = vpop.f32.mrb[0].mxu0
        %578 = vdwg.mxu0
        %v579 = vld [vmem:[%s5] sm:$0x1]
        %581 = vset.pattern.permute.xlu0 0
        %582 = vperm.xlu0 %581, %v574
        %v583 = vpop.permute.xlu0 %582
        %v586 = vlaneseq
        %v587 = vshrl.u32 %v586, 7
        %v588 = vsub.s32 0, %v587
        %v589 = vrot.slane %v579, %v588
        %v591 = vmul.f32 %v583, %v589
        %v592 = vld [vmem:[#allocation13] sm:$0x1]
        %v594 = vlaneseq
        %v595 = vshrl.u32 %v594, 7
        %v596 = vsub.s32 0, %v595
        %v597 = vrot.slane %v592, %v596
        %v599 = vadd.f32 %v591, %v597
        %vm600 = vcmp.gt.f32.partialorder %v599, 20.0
        %v601 = vmul.f32 %v599, 1.442695
        %v602 = vpow.pop %v601
        %v603 = vadd.f32 %v602, 1.0
        %v604 = vlog2.pop %v603
        %v605 = vmul.f32 %v604, 0.6931472
        %v606 = vmul.f32 -0.5, %v602
        %v607 = vadd.f32 %v606, 1.0
        %v608 = vmul.f32 %v607, %v602
        %v609 = vand.u32 2147483647, %v602
        %vm610 = vcmp.lt.f32.partialorder %v609, 0.0004427343
        %v611 = vsel %vm610, %v608, %v605
        %v612 = vsel %vm600, %v599, %v611
        %v613 = vld [vmem:[%s7] sm:$0xff]
        %v614 = vld [vmem:[%s7 + $0x8] sm:$0xff]
        %v615 = vmul.f32 %v613, 1.442695
        %v616 = vpow.pop %v615
        %v617 = vmul.f32 %v614, 1.442695
        %v618 = vpow.pop %v617
        %v620 = vcombine.high %v612, %v612
        %v622 = vunpack.c.l.s4 1966171168
        %v623 = vunpack.c.0.s8 %v622
        %v624 = vlaneseq
        %v625 = vshrl.u32 %v624, 7
        %v626 = vsub.s32 %v623, %v625
        %v627 = vrot.slane %v612, %v626
        %v629 = vunpack.c.l.s4 1966171168
        %v630 = vunpack.c.0.s8 %v629
        %v631 = vlaneseq
        %v632 = vshrl.u32 %v631, 7
        %v633 = vsub.s32 %v630, %v632
        %v634 = vrot.slane %v620, %v633
        %v635 = vcombine.high %v627, %v627
        %v636 = vcombine.high %v634, %v634
        %v638 = vunpack.c.l.s4 1966171168
        %v639 = vunpack.c.0.s8 %v638
        %v640 = vlaneseq
        %v641 = vshrl.u32 %v640, 7
        %v642 = vsub.s32 %v639, %v641
        %v643 = vrot.slane %v627, %v642
        %v645 = vunpack.c.l.s4 1966171168
        %v646 = vunpack.c.0.s8 %v645
        %v647 = vlaneseq
        %v648 = vshrl.u32 %v647, 7
        %v649 = vsub.s32 %v646, %v648
        %v650 = vrot.slane %v634, %v649
        %v652 = vunpack.c.l.s4 1966171168
        %v653 = vunpack.c.0.s8 %v652
        %v654 = vlaneseq
        %v655 = vshrl.u32 %v654, 7
        %v656 = vsub.s32 %v653, %v655
        %v657 = vrot.slane %v635, %v656
        %v659 = vunpack.c.l.s4 1966171168
        %v660 = vunpack.c.0.s8 %v659
        %v661 = vlaneseq
        %v662 = vshrl.u32 %v661, 7
        %v663 = vsub.s32 %v660, %v662
        %v664 = vrot.slane %v636, %v663
        %v665 = vcombine.high %v643, %v643
        %v666 = vcombine.high %v650, %v650
        %v667 = vcombine.high %v657, %v657
        %v668 = vcombine.high %v664, %v664
        %v677 = vsub.f32 0.0, %v643
        %v678 = vsub.f32 0.0, %v657
        %v679 = vsub.f32 0.0, %v665
        %v680 = vsub.f32 0.0, %v667
        %v681 = vsub.f32 0.0, %v650
        %v682 = vsub.f32 0.0, %v664
        %v683 = vsub.f32 0.0, %v666
        %v684 = vsub.f32 0.0, %v668
        %v693 = vlaneseq
        %v694 = vshrl.u32 %v693, 7
        %v695 = vsub.s32 0, %v694
        %v696 = vrot.slane %v677, %v695
        %v697 = vlaneseq
        %v698 = vshrl.u32 %v697, 7
        %v699 = vsub.s32 0, %v698
        %v700 = vrot.slane %v678, %v699
        %v701 = vlaneseq
        %v702 = vshrl.u32 %v701, 7
        %v703 = vsub.s32 0, %v702
        %v704 = vrot.slane %v679, %v703
        %v705 = vlaneseq
        %v706 = vshrl.u32 %v705, 7
        %v707 = vsub.s32 0, %v706
        %v708 = vrot.slane %v680, %v707
        %v709 = vlaneseq
        %v710 = vshrl.u32 %v709, 7
        %v711 = vsub.s32 0, %v710
        %v712 = vrot.slane %v681, %v711
        %v713 = vlaneseq
        %v714 = vshrl.u32 %v713, 7
        %v715 = vsub.s32 0, %v714
        %v716 = vrot.slane %v682, %v715
        %v717 = vlaneseq
        %v718 = vshrl.u32 %v717, 7
        %v719 = vsub.s32 0, %v718
        %v720 = vrot.slane %v683, %v719
        %v721 = vlaneseq
        %v722 = vshrl.u32 %v721, 7
        %v723 = vsub.s32 0, %v722
        %v724 = vrot.slane %v684, %v723
        %v733 = vmul.f32 %v696, %v616
        %v734 = vmul.f32 %v696, %v618
        %v735 = vmul.f32 %v700, %v616
        %v736 = vmul.f32 %v700, %v618
        %v737 = vmul.f32 %v704, %v616
        %v738 = vmul.f32 %v704, %v618
        %v739 = vmul.f32 %v708, %v616
        %v740 = vmul.f32 %v708, %v618
        %v741 = vmul.f32 %v712, %v616
        %v742 = vmul.f32 %v712, %v618
        %v743 = vmul.f32 %v716, %v616
        %v744 = vmul.f32 %v716, %v618
        %v745 = vmul.f32 %v720, %v616
        %v746 = vmul.f32 %v720, %v618
        %v747 = vmul.f32 %v724, %v616
        %v748 = vmul.f32 %v724, %v618
        %v749 = vmul.f32 %v733, 1.442695
        %v750 = vpow.pop %v749
        %v751 = vmul.f32 %v734, 1.442695
        %v752 = vpow.pop %v751
        %v753 = vmul.f32 %v735, 1.442695
        %v754 = vpow.pop %v753
        %v755 = vmul.f32 %v736, 1.442695
        %v756 = vpow.pop %v755
        %v757 = vmul.f32 %v737, 1.442695
        %v758 = vpow.pop %v757
        %v759 = vmul.f32 %v738, 1.442695
        %v760 = vpow.pop %v759
        %v761 = vmul.f32 %v739, 1.442695
        %v762 = vpow.pop %v761
        %v763 = vmul.f32 %v740, 1.442695
        %v764 = vpow.pop %v763
        %v765 = vmul.f32 %v741, 1.442695
        %v766 = vpow.pop %v765
        %v767 = vmul.f32 %v742, 1.442695
        %v768 = vpow.pop %v767
        %v769 = vmul.f32 %v743, 1.442695
        %v770 = vpow.pop %v769
        %v771 = vmul.f32 %v744, 1.442695
        %v772 = vpow.pop %v771
        %v773 = vmul.f32 %v745, 1.442695
        %v774 = vpow.pop %v773
        %v775 = vmul.f32 %v746, 1.442695
        %v776 = vpow.pop %v775
        %v777 = vmul.f32 %v747, 1.442695
        %v778 = vpow.pop %v777
        %v779 = vmul.f32 %v748, 1.442695
        %v780 = vpow.pop %v779
        %781 = vst.msk [vmem:[#allocation4] sm:$0xff] %vm477, %v750
        %782 = vst.msk [vmem:[#allocation4 + $0x8] sm:$0xff] %vm477, %v752
        %783 = vst.msk [vmem:[#allocation4 + $0x10] sm:$0xff] %vm477, %v754
        %784 = vst.msk [vmem:[#allocation4 + $0x18] sm:$0xff] %vm477, %v756
        %785 = vst.msk [vmem:[#allocation4 + $0x20] sm:$0xff] %vm477, %v758
        %786 = vst.msk [vmem:[#allocation4 + $0x28] sm:$0xff] %vm477, %v760
        %787 = vst.msk [vmem:[#allocation4 + $0x30] sm:$0xff] %vm477, %v762
        %788 = vst.msk [vmem:[#allocation4 + $0x38] sm:$0xff] %vm477, %v764
        %789 = vst.msk [vmem:[#allocation4 + $0x40] sm:$0xff] %vm477, %v766
        %790 = vst.msk [vmem:[#allocation4 + $0x48] sm:$0xff] %vm477, %v768
        %791 = vst.msk [vmem:[#allocation4 + $0x50] sm:$0xff] %vm477, %v770
        %792 = vst.msk [vmem:[#allocation4 + $0x58] sm:$0xff] %vm477, %v772
        %793 = vst.msk [vmem:[#allocation4 + $0x60] sm:$0xff] %vm477, %v774
        %794 = vst.msk [vmem:[#allocation4 + $0x68] sm:$0xff] %vm477, %v776
        %795 = vst.msk [vmem:[#allocation4 + $0x70] sm:$0xff] %vm477, %v778
        %796 = vst.msk [vmem:[#allocation4 + $0x78] sm:$0xff] %vm477, %v780
        %v797 = vmul.f32 %v612, %v526
        %v799 = vcombine.high %v797, %v797
        %v801 = vunpack.c.l.s4 1966171168
        %v802 = vunpack.c.0.s8 %v801
        %v803 = vlaneseq
        %v804 = vshrl.u32 %v803, 7
        %v805 = vsub.s32 %v802, %v804
        %v806 = vrot.slane %v797, %v805
        %v808 = vunpack.c.l.s4 1966171168
        %v809 = vunpack.c.0.s8 %v808
        %v810 = vlaneseq
        %v811 = vshrl.u32 %v810, 7
        %v812 = vsub.s32 %v809, %v811
        %v813 = vrot.slane %v799, %v812
        %v814 = vcombine.high %v806, %v806
        %v815 = vcombine.high %v813, %v813
        %v817 = vunpack.c.l.s4 1966171168
        %v818 = vunpack.c.0.s8 %v817
        %v819 = vlaneseq
        %v820 = vshrl.u32 %v819, 7
        %v821 = vsub.s32 %v818, %v820
        %v822 = vrot.slane %v806, %v821
        %v824 = vunpack.c.l.s4 1966171168
        %v825 = vunpack.c.0.s8 %v824
        %v826 = vlaneseq
        %v827 = vshrl.u32 %v826, 7
        %v828 = vsub.s32 %v825, %v827
        %v829 = vrot.slane %v813, %v828
        %v831 = vunpack.c.l.s4 1966171168
        %v832 = vunpack.c.0.s8 %v831
        %v833 = vlaneseq
        %v834 = vshrl.u32 %v833, 7
        %v835 = vsub.s32 %v832, %v834
        %v836 = vrot.slane %v814, %v835
        %v838 = vunpack.c.l.s4 1966171168
        %v839 = vunpack.c.0.s8 %v838
        %v840 = vlaneseq
        %v841 = vshrl.u32 %v840, 7
        %v842 = vsub.s32 %v839, %v841
        %v843 = vrot.slane %v815, %v842
        %v844 = vcombine.high %v822, %v822
        %v845 = vcombine.high %v829, %v829
        %v846 = vcombine.high %v836, %v836
        %v847 = vcombine.high %v843, %v843
        %v848 = vlaneseq
        %v849 = vshrl.u32 %v848, 7
        %v850 = vsub.s32 0, %v849
        %v851 = vrot.slane %v574, %v850
        %s853 = sor.u32 256, 1
        %854 = vbcast.lane.b32.xlu0 %v851, %s853
        %v855 = vpop.permute.xlu0 %854
        %s857 = sor.u32 256, 9
        %858 = vbcast.lane.b32.xlu0 %v851, %s857
        %v859 = vpop.permute.xlu0 %858
        %v860 = vlaneseq
        %v861 = vshrl.u32 %v860, 7
        %v862 = vsub.s32 1, %v861
        %v863 = vrot.slane %v574, %v862
        %s865 = sor.u32 256, 1
        %866 = vbcast.lane.b32.xlu0 %v863, %s865
        %v867 = vpop.permute.xlu0 %866
        %s869 = sor.u32 256, 9
        %870 = vbcast.lane.b32.xlu0 %v863, %s869
        %v871 = vpop.permute.xlu0 %870
        %v872 = vlaneseq
        %v873 = vshrl.u32 %v872, 7
        %v874 = vsub.s32 2, %v873
        %v875 = vrot.slane %v574, %v874
        %s877 = sor.u32 256, 1
        %878 = vbcast.lane.b32.xlu0 %v875, %s877
        %v879 = vpop.permute.xlu0 %878
        %s881 = sor.u32 256, 9
        %882 = vbcast.lane.b32.xlu0 %v875, %s881
        %v883 = vpop.permute.xlu0 %882
        %v884 = vlaneseq
        %v885 = vshrl.u32 %v884, 7
        %v886 = vsub.s32 3, %v885
        %v887 = vrot.slane %v574, %v886
        %s889 = sor.u32 256, 1
        %890 = vbcast.lane.b32.xlu0 %v887, %s889
        %v891 = vpop.permute.xlu0 %890
        %s893 = sor.u32 256, 9
        %894 = vbcast.lane.b32.xlu0 %v887, %s893
        %v895 = vpop.permute.xlu0 %894
        %v896 = vlaneseq
        %v897 = vshrl.u32 %v896, 7
        %v898 = vsub.s32 4, %v897
        %v899 = vrot.slane %v574, %v898
        %s901 = sor.u32 256, 1
        %902 = vbcast.lane.b32.xlu0 %v899, %s901
        %v903 = vpop.permute.xlu0 %902
        %s905 = sor.u32 256, 9
        %906 = vbcast.lane.b32.xlu0 %v899, %s905
        %v907 = vpop.permute.xlu0 %906
        %v908 = vlaneseq
        %v909 = vshrl.u32 %v908, 7
        %v910 = vsub.s32 5, %v909
        %v911 = vrot.slane %v574, %v910
        %s913 = sor.u32 256, 1
        %914 = vbcast.lane.b32.xlu0 %v911, %s913
        %v915 = vpop.permute.xlu0 %914
        %s917 = sor.u32 256, 9
        %918 = vbcast.lane.b32.xlu0 %v911, %s917
        %v919 = vpop.permute.xlu0 %918
        %v920 = vlaneseq
        %v921 = vshrl.u32 %v920, 7
        %v922 = vsub.s32 6, %v921
        %v923 = vrot.slane %v574, %v922
        %s925 = sor.u32 256, 1
        %926 = vbcast.lane.b32.xlu0 %v923, %s925
        %v927 = vpop.permute.xlu0 %926
        %s929 = sor.u32 256, 9
        %930 = vbcast.lane.b32.xlu0 %v923, %s929
        %v931 = vpop.permute.xlu0 %930
        %v932 = vlaneseq
        %v933 = vshrl.u32 %v932, 7
        %v934 = vsub.s32 7, %v933
        %v935 = vrot.slane %v574, %v934
        %s937 = sor.u32 256, 1
        %938 = vbcast.lane.b32.xlu0 %v935, %s937
        %v939 = vpop.permute.xlu0 %938
        %s941 = sor.u32 256, 9
        %942 = vbcast.lane.b32.xlu0 %v935, %s941
        %v943 = vpop.permute.xlu0 %942
        %v944 = vlaneseq
        %v945 = vshrl.u32 %v944, 7
        %v946 = vsub.s32 0, %v945
        %v947 = vrot.slane %v822, %v946
        %v948 = vlaneseq
        %v949 = vshrl.u32 %v948, 7
        %v950 = vsub.s32 0, %v949
        %v951 = vrot.slane %v836, %v950
        %v952 = vlaneseq
        %v953 = vshrl.u32 %v952, 7
        %v954 = vsub.s32 0, %v953
        %v955 = vrot.slane %v844, %v954
        %v956 = vlaneseq
        %v957 = vshrl.u32 %v956, 7
        %v958 = vsub.s32 0, %v957
        %v959 = vrot.slane %v846, %v958
        %v960 = vlaneseq
        %v961 = vshrl.u32 %v960, 7
        %v962 = vsub.s32 0, %v961
        %v963 = vrot.slane %v829, %v962
        %v964 = vlaneseq
        %v965 = vshrl.u32 %v964, 7
        %v966 = vsub.s32 0, %v965
        %v967 = vrot.slane %v843, %v966
        %v968 = vlaneseq
        %v969 = vshrl.u32 %v968, 7
        %v970 = vsub.s32 0, %v969
        %v971 = vrot.slane %v845, %v970
        %v972 = vlaneseq
        %v973 = vshrl.u32 %v972, 7
        %v974 = vsub.s32 0, %v973
        %v975 = vrot.slane %v847, %v974
        %v984 = vmul.f32 %v947, %v855
        %v985 = vmul.f32 %v947, %v859
        %v986 = vmul.f32 %v951, %v867
        %v987 = vmul.f32 %v951, %v871
        %v988 = vmul.f32 %v955, %v879
        %v989 = vmul.f32 %v955, %v883
        %v990 = vmul.f32 %v959, %v891
        %v991 = vmul.f32 %v959, %v895
        %v992 = vmul.f32 %v963, %v903
        %v993 = vmul.f32 %v963, %v907
        %v994 = vmul.f32 %v967, %v915
        %v995 = vmul.f32 %v967, %v919
        %v996 = vmul.f32 %v971, %v927
        %v997 = vmul.f32 %v971, %v931
        %v998 = vmul.f32 %v975, %v939
        %v999 = vmul.f32 %v975, %v943
        %1000 = vst.msk [vmem:[#allocation5] sm:$0xff] %vm477, %v984
        %1001 = vst.msk [vmem:[#allocation5 + $0x8] sm:$0xff] %vm477, %v985
        %1002 = vst.msk [vmem:[#allocation5 + $0x10] sm:$0xff] %vm477, %v986
        %1003 = vst.msk [vmem:[#allocation5 + $0x18] sm:$0xff] %vm477, %v987
        %1004 = vst.msk [vmem:[#allocation5 + $0x20] sm:$0xff] %vm477, %v988
        %1005 = vst.msk [vmem:[#allocation5 + $0x28] sm:$0xff] %vm477, %v989
        %1006 = vst.msk [vmem:[#allocation5 + $0x30] sm:$0xff] %vm477, %v990
        %1007 = vst.msk [vmem:[#allocation5 + $0x38] sm:$0xff] %vm477, %v991
        %1008 = vst.msk [vmem:[#allocation5 + $0x40] sm:$0xff] %vm477, %v992
        %1009 = vst.msk [vmem:[#allocation5 + $0x48] sm:$0xff] %vm477, %v993
        %1010 = vst.msk [vmem:[#allocation5 + $0x50] sm:$0xff] %vm477, %v994
        %1011 = vst.msk [vmem:[#allocation5 + $0x58] sm:$0xff] %vm477, %v995
        %1012 = vst.msk [vmem:[#allocation5 + $0x60] sm:$0xff] %vm477, %v996
        %1013 = vst.msk [vmem:[#allocation5 + $0x68] sm:$0xff] %vm477, %v997
        %1014 = vst.msk [vmem:[#allocation5 + $0x70] sm:$0xff] %vm477, %v998
        %1015 = vst.msk [vmem:[#allocation5 + $0x78] sm:$0xff] %vm477, %v999
        %s1017 = sor.u32 256, 17
        %1018 = vbcast.lane.b32.xlu0 %v851, %s1017
        %v1019 = vpop.permute.xlu0 %1018
        %s1021 = sor.u32 256, 25
        %1022 = vbcast.lane.b32.xlu0 %v851, %s1021
        %v1023 = vpop.permute.xlu0 %1022
        %s1025 = sor.u32 256, 17
        %1026 = vbcast.lane.b32.xlu0 %v863, %s1025
        %v1027 = vpop.permute.xlu0 %1026
        %s1029 = sor.u32 256, 25
        %1030 = vbcast.lane.b32.xlu0 %v863, %s1029
        %v1031 = vpop.permute.xlu0 %1030
        %s1033 = sor.u32 256, 17
        %1034 = vbcast.lane.b32.xlu0 %v875, %s1033
        %v1035 = vpop.permute.xlu0 %1034
        %s1037 = sor.u32 256, 25
        %1038 = vbcast.lane.b32.xlu0 %v875, %s1037
        %v1039 = vpop.permute.xlu0 %1038
        %s1041 = sor.u32 256, 17
        %1042 = vbcast.lane.b32.xlu0 %v887, %s1041
        %v1043 = vpop.permute.xlu0 %1042
        %s1045 = sor.u32 256, 25
        %1046 = vbcast.lane.b32.xlu0 %v887, %s1045
        %v1047 = vpop.permute.xlu0 %1046
        %s1049 = sor.u32 256, 17
        %1050 = vbcast.lane.b32.xlu0 %v899, %s1049
        %v1051 = vpop.permute.xlu0 %1050
        %s1053 = sor.u32 256, 25
        %1054 = vbcast.lane.b32.xlu0 %v899, %s1053
        %v1055 = vpop.permute.xlu0 %1054
        %s1057 = sor.u32 256, 17
        %1058 = vbcast.lane.b32.xlu0 %v911, %s1057
        %v1059 = vpop.permute.xlu0 %1058
        %s1061 = sor.u32 256, 25
        %1062 = vbcast.lane.b32.xlu0 %v911, %s1061
        %v1063 = vpop.permute.xlu0 %1062
        %s1065 = sor.u32 256, 17
        %1066 = vbcast.lane.b32.xlu0 %v923, %s1065
        %v1067 = vpop.permute.xlu0 %1066
        %s1069 = sor.u32 256, 25
        %1070 = vbcast.lane.b32.xlu0 %v923, %s1069
        %v1071 = vpop.permute.xlu0 %1070
        %s1073 = sor.u32 256, 17
        %1074 = vbcast.lane.b32.xlu0 %v935, %s1073
        %v1075 = vpop.permute.xlu0 %1074
        %s1077 = sor.u32 256, 25
        %1078 = vbcast.lane.b32.xlu0 %v935, %s1077
        %v1079 = vpop.permute.xlu0 %1078
        %vm1080 = vcmask 7168
        %1081 = vst.msk [vmem:[#allocation6] sm:$0xff] %vm1080, %v1019
        %1082 = vst.msk [vmem:[#allocation6 + $0x8] sm:$0xff] %vm1080, %v1023
        %1083 = vst.msk [vmem:[#allocation6 + $0x10] sm:$0xff] %vm1080, %v1027
        %1084 = vst.msk [vmem:[#allocation6 + $0x18] sm:$0xff] %vm1080, %v1031
        %1085 = vst.msk [vmem:[#allocation6 + $0x20] sm:$0xff] %vm1080, %v1035
        %1086 = vst.msk [vmem:[#allocation6 + $0x28] sm:$0xff] %vm1080, %v1039
        %1087 = vst.msk [vmem:[#allocation6 + $0x30] sm:$0xff] %vm1080, %v1043
        %1088 = vst.msk [vmem:[#allocation6 + $0x38] sm:$0xff] %vm1080, %v1047
        %1089 = vst.msk [vmem:[#allocation6 + $0x40] sm:$0xff] %vm1080, %v1051
        %1090 = vst.msk [vmem:[#allocation6 + $0x48] sm:$0xff] %vm1080, %v1055
        %1091 = vst.msk [vmem:[#allocation6 + $0x50] sm:$0xff] %vm1080, %v1059
        %1092 = vst.msk [vmem:[#allocation6 + $0x58] sm:$0xff] %vm1080, %v1063
        %1093 = vst.msk [vmem:[#allocation6 + $0x60] sm:$0xff] %vm1080, %v1067
        %1094 = vst.msk [vmem:[#allocation6 + $0x68] sm:$0xff] %vm1080, %v1071
        %1095 = vst.msk [vmem:[#allocation6 + $0x70] sm:$0xff] %vm1080, %v1075
        %1096 = vst.msk [vmem:[#allocation6 + $0x78] sm:$0xff] %vm1080, %v1079
        // Predicated region
        $region77: #{tpu_custom_call.1} parent=59 // pred_check
          %p1097 = pneg %p418
        $region78: #{tpu_custom_call.1} parent=59 // pred_check_branch
          %1099 = sbr.rel (%p1097) target = $region80
        $region79: #{tpu_custom_call.1} parent=59 // pred_region
          %1100 = vst.msk [vmem:[#allocation5] sm:$0xff] %vm477, 0.0
          %1101 = vst.msk [vmem:[#allocation5 + $0x8] sm:$0xff] %vm477, 0.0
        $region80: #{tpu_custom_call.1} parent=59 // pred_fallthru
          _
        %v1102 = vld [vmem:[#allocation2] sm:$0xff]
        %v1103 = vld [vmem:[#allocation2 + $0x8] sm:$0xff]
        %v1104 = vld [vmem:[#allocation4] sm:$0xff]
        %v1105 = vld [vmem:[#allocation4 + $0x8] sm:$0xff]
        %v1106 = vmul.f32 %v1104, %v1102
        %v1107 = vmul.f32 %v1105, %v1103
        %v1108 = vld [vmem:[#allocation5] sm:$0xff]
        %v1109 = vld [vmem:[#allocation5 + $0x8] sm:$0xff]
        %v1110 = vadd.f32 %v1106, %v1108
        %v1111 = vadd.f32 %v1107, %v1109
        %v1112 = vld [vmem:[#allocation6] sm:$0xff]
        %v1113 = vld [vmem:[#allocation6 + $0x8] sm:$0xff]
        %1115 = vset.pattern.permute.xlu0 0
        %1116 = vperm.xlu0 %1115, %v1112
        %v1117 = vpop.permute.xlu0 %1116
        %1120 = vset.pattern.permute.xlu0 0
        %1121 = vperm.xlu0 %1120, %v1113
        %v1122 = vpop.permute.xlu0 %1121
        %v1124 = vmul.f32 %v1110, %v1117
        %v1125 = vmul.f32 %v1111, %v1122
        %v1126 = vsel %vm477, %v1124, 0.0
        %v1127 = vsel %vm477, %v1125, 0.0
        %v1128 = vadd.f32 %v1126, %v1127
        %v1129 = vrot.slane %v1128, 4
        %v1130 = vadd.f32 %v1128, %v1129
        %v1131 = vrot.slane %v1130, 2
        %v1132 = vadd.f32 %v1130, %v1131
        %v1133 = vrot.slane %v1132, 1
        %v1134 = vadd.f32 %v1132, %v1133
        %vm1135 = vcmask 122880
        %1136 = vst.msk [vmem:[#allocation7] sm:$0x1] %vm1135, %v1134
        %s1137 = scalar_lea.vmem [#allocation4], 16
        %v1138 = vld [vmem:[%s1137] sm:$0xff]
        %v1139 = vld [vmem:[%s1137 + $0x8] sm:$0xff]
        %v1140 = vmul.f32 %v1138, %v1110
        %v1141 = vmul.f32 %v1139, %v1111
        %s1142 = scalar_lea.vmem [#allocation5], 16
        %v1143 = vld [vmem:[%s1142] sm:$0xff]
        %v1144 = vld [vmem:[%s1142 + $0x8] sm:$0xff]
        %v1145 = vadd.f32 %v1140, %v1143
        %v1146 = vadd.f32 %v1141, %v1144
        %s1147 = scalar_lea.vmem [#allocation6], 16
        %v1148 = vld [vmem:[%s1147] sm:$0xff]
        %v1149 = vld [vmem:[%s1147 + $0x8] sm:$0xff]
        %1151 = vset.pattern.permute.xlu0 0
        %1152 = vperm.xlu0 %1151, %v1148
        %v1153 = vpop.permute.xlu0 %1152
        %1156 = vset.pattern.permute.xlu0 0
        %1157 = vperm.xlu0 %1156, %v1149
        %v1158 = vpop.permute.xlu0 %1157
        %v1160 = vmul.f32 %v1145, %v1153
        %v1161 = vmul.f32 %v1146, %v1158
        %v1162 = vsel %vm477, %v1160, 0.0
        %v1163 = vsel %vm477, %v1161, 0.0
        %v1164 = vadd.f32 %v1162, %v1163
        %v1165 = vrot.slane %v1164, 4
        %v1166 = vadd.f32 %v1164, %v1165
        %v1167 = vrot.slane %v1166, 2
        %v1168 = vadd.f32 %v1166, %v1167
        %v1169 = vrot.slane %v1168, 1
        %v1170 = vadd.f32 %v1168, %v1169
        %1171 = vst.msk [vmem:[#allocation7 + $0x1] sm:$0x1] %vm1135, %v1170
        %s1172 = scalar_lea.vmem [#allocation4], 32
        %v1173 = vld [vmem:[%s1172] sm:$0xff]
        %v1174 = vld [vmem:[%s1172 + $0x8] sm:$0xff]
        %v1175 = vmul.f32 %v1173, %v1145
        %v1176 = vmul.f32 %v1174, %v1146
        %s1177 = scalar_lea.vmem [#allocation5], 32
        %v1178 = vld [vmem:[%s1177] sm:$0xff]
        %v1179 = vld [vmem:[%s1177 + $0x8] sm:$0xff]
        %v1180 = vadd.f32 %v1175, %v1178
        %v1181 = vadd.f32 %v1176, %v1179
        %s1182 = scalar_lea.vmem [#allocation6], 32
        %v1183 = vld [vmem:[%s1182] sm:$0xff]
        %v1184 = vld [vmem:[%s1182 + $0x8] sm:$0xff]
        %1186 = vset.pattern.permute.xlu0 0
        %1187 = vperm.xlu0 %1186, %v1183
        %v1188 = vpop.permute.xlu0 %1187
        %1191 = vset.pattern.permute.xlu0 0
        %1192 = vperm.xlu0 %1191, %v1184
        %v1193 = vpop.permute.xlu0 %1192
        %v1195 = vmul.f32 %v1180, %v1188
        %v1196 = vmul.f32 %v1181, %v1193
        %v1197 = vsel %vm477, %v1195, 0.0
        %v1198 = vsel %vm477, %v1196, 0.0
        %v1199 = vadd.f32 %v1197, %v1198
        %v1200 = vrot.slane %v1199, 4
        %v1201 = vadd.f32 %v1199, %v1200
        %v1202 = vrot.slane %v1201, 2
        %v1203 = vadd.f32 %v1201, %v1202
        %v1204 = vrot.slane %v1203, 1
        %v1205 = vadd.f32 %v1203, %v1204
        %1206 = vst.msk [vmem:[#allocation7 + $0x2] sm:$0x1] %vm1135, %v1205
        %s1207 = scalar_lea.vmem [#allocation4], 48
        %v1208 = vld [vmem:[%s1207] sm:$0xff]
        %v1209 = vld [vmem:[%s1207 + $0x8] sm:$0xff]
        %v1210 = vmul.f32 %v1208, %v1180
        %v1211 = vmul.f32 %v1209, %v1181
        %s1212 = scalar_lea.vmem [#allocation5], 48
        %v1213 = vld [vmem:[%s1212] sm:$0xff]
        %v1214 = vld [vmem:[%s1212 + $0x8] sm:$0xff]
        %v1215 = vadd.f32 %v1210, %v1213
        %v1216 = vadd.f32 %v1211, %v1214
        %s1217 = scalar_lea.vmem [#allocation6], 48
        %v1218 = vld [vmem:[%s1217] sm:$0xff]
        %v1219 = vld [vmem:[%s1217 + $0x8] sm:$0xff]
        %1221 = vset.pattern.permute.xlu0 0
        %1222 = vperm.xlu0 %1221, %v1218
        %v1223 = vpop.permute.xlu0 %1222
        %1226 = vset.pattern.permute.xlu0 0
        %1227 = vperm.xlu0 %1226, %v1219
        %v1228 = vpop.permute.xlu0 %1227
        %v1230 = vmul.f32 %v1215, %v1223
        %v1231 = vmul.f32 %v1216, %v1228
        %v1232 = vsel %vm477, %v1230, 0.0
        %v1233 = vsel %vm477, %v1231, 0.0
        %v1234 = vadd.f32 %v1232, %v1233
        %v1235 = vrot.slane %v1234, 4
        %v1236 = vadd.f32 %v1234, %v1235
        %v1237 = vrot.slane %v1236, 2
        %v1238 = vadd.f32 %v1236, %v1237
        %v1239 = vrot.slane %v1238, 1
        %v1240 = vadd.f32 %v1238, %v1239
        %1241 = vst.msk [vmem:[#allocation7 + $0x3] sm:$0x1] %vm1135, %v1240
        %s1242 = scalar_lea.vmem [#allocation4], 64
        %v1243 = vld [vmem:[%s1242] sm:$0xff]
        %v1244 = vld [vmem:[%s1242 + $0x8] sm:$0xff]
        %v1245 = vmul.f32 %v1243, %v1215
        %v1246 = vmul.f32 %v1244, %v1216
        %s1247 = scalar_lea.vmem [#allocation5], 64
        %v1248 = vld [vmem:[%s1247] sm:$0xff]
        %v1249 = vld [vmem:[%s1247 + $0x8] sm:$0xff]
        %v1250 = vadd.f32 %v1245, %v1248
        %v1251 = vadd.f32 %v1246, %v1249
        %s1252 = scalar_lea.vmem [#allocation6], 64
        %v1253 = vld [vmem:[%s1252] sm:$0xff]
        %v1254 = vld [vmem:[%s1252 + $0x8] sm:$0xff]
        %1256 = vset.pattern.permute.xlu0 0
        %1257 = vperm.xlu0 %1256, %v1253
        %v1258 = vpop.permute.xlu0 %1257
        %1261 = vset.pattern.permute.xlu0 0
        %1262 = vperm.xlu0 %1261, %v1254
        %v1263 = vpop.permute.xlu0 %1262
        %v1265 = vmul.f32 %v1250, %v1258
        %v1266 = vmul.f32 %v1251, %v1263
        %v1267 = vsel %vm477, %v1265, 0.0
        %v1268 = vsel %vm477, %v1266, 0.0
        %v1269 = vadd.f32 %v1267, %v1268
        %v1270 = vrot.slane %v1269, 4
        %v1271 = vadd.f32 %v1269, %v1270
        %v1272 = vrot.slane %v1271, 2
        %v1273 = vadd.f32 %v1271, %v1272
        %v1274 = vrot.slane %v1273, 1
        %v1275 = vadd.f32 %v1273, %v1274
        %1276 = vst.msk [vmem:[#allocation7 + $0x4] sm:$0x1] %vm1135, %v1275
        %s1277 = scalar_lea.vmem [#allocation4], 80
        %v1278 = vld [vmem:[%s1277] sm:$0xff]
        %v1279 = vld [vmem:[%s1277 + $0x8] sm:$0xff]
        %v1280 = vmul.f32 %v1278, %v1250
        %v1281 = vmul.f32 %v1279, %v1251
        %s1282 = scalar_lea.vmem [#allocation5], 80
        %v1283 = vld [vmem:[%s1282] sm:$0xff]
        %v1284 = vld [vmem:[%s1282 + $0x8] sm:$0xff]
        %v1285 = vadd.f32 %v1280, %v1283
        %v1286 = vadd.f32 %v1281, %v1284
        %s1287 = scalar_lea.vmem [#allocation6], 80
        %v1288 = vld [vmem:[%s1287] sm:$0xff]
        %v1289 = vld [vmem:[%s1287 + $0x8] sm:$0xff]
        %1291 = vset.pattern.permute.xlu0 0
        %1292 = vperm.xlu0 %1291, %v1288
        %v1293 = vpop.permute.xlu0 %1292
        %1296 = vset.pattern.permute.xlu0 0
        %1297 = vperm.xlu0 %1296, %v1289
        %v1298 = vpop.permute.xlu0 %1297
        %v1300 = vmul.f32 %v1285, %v1293
        %v1301 = vmul.f32 %v1286, %v1298
        %v1302 = vsel %vm477, %v1300, 0.0
        %v1303 = vsel %vm477, %v1301, 0.0
        %v1304 = vadd.f32 %v1302, %v1303
        %v1305 = vrot.slane %v1304, 4
        %v1306 = vadd.f32 %v1304, %v1305
        %v1307 = vrot.slane %v1306, 2
        %v1308 = vadd.f32 %v1306, %v1307
        %v1309 = vrot.slane %v1308, 1
        %v1310 = vadd.f32 %v1308, %v1309
        %1311 = vst.msk [vmem:[#allocation7 + $0x5] sm:$0x1] %vm1135, %v1310
        %s1312 = scalar_lea.vmem [#allocation4], 96
        %v1313 = vld [vmem:[%s1312] sm:$0xff]
        %v1314 = vld [vmem:[%s1312 + $0x8] sm:$0xff]
        %v1315 = vmul.f32 %v1313, %v1285
        %v1316 = vmul.f32 %v1314, %v1286
        %s1317 = scalar_lea.vmem [#allocation5], 96
        %v1318 = vld [vmem:[%s1317] sm:$0xff]
        %v1319 = vld [vmem:[%s1317 + $0x8] sm:$0xff]
        %v1320 = vadd.f32 %v1315, %v1318
        %v1321 = vadd.f32 %v1316, %v1319
        %s1322 = scalar_lea.vmem [#allocation6], 96
        %v1323 = vld [vmem:[%s1322] sm:$0xff]
        %v1324 = vld [vmem:[%s1322 + $0x8] sm:$0xff]
        %1326 = vset.pattern.permute.xlu0 0
        %1327 = vperm.xlu0 %1326, %v1323
        %v1328 = vpop.permute.xlu0 %1327
        %1331 = vset.pattern.permute.xlu0 0
        %1332 = vperm.xlu0 %1331, %v1324
        %v1333 = vpop.permute.xlu0 %1332
        %v1335 = vmul.f32 %v1320, %v1328
        %v1336 = vmul.f32 %v1321, %v1333
        %v1337 = vsel %vm477, %v1335, 0.0
        %v1338 = vsel %vm477, %v1336, 0.0
        %v1339 = vadd.f32 %v1337, %v1338
        %v1340 = vrot.slane %v1339, 4
        %v1341 = vadd.f32 %v1339, %v1340
        %v1342 = vrot.slane %v1341, 2
        %v1343 = vadd.f32 %v1341, %v1342
        %v1344 = vrot.slane %v1343, 1
        %v1345 = vadd.f32 %v1343, %v1344
        %1346 = vst.msk [vmem:[#allocation7 + $0x6] sm:$0x1] %vm1135, %v1345
        %s1347 = scalar_lea.vmem [#allocation4], 112
        %v1348 = vld [vmem:[%s1347] sm:$0xff]
        %v1349 = vld [vmem:[%s1347 + $0x8] sm:$0xff]
        %v1350 = vmul.f32 %v1348, %v1320
        %v1351 = vmul.f32 %v1349, %v1321
        %s1352 = scalar_lea.vmem [#allocation5], 112
        %v1353 = vld [vmem:[%s1352] sm:$0xff]
        %v1354 = vld [vmem:[%s1352 + $0x8] sm:$0xff]
        %v1355 = vadd.f32 %v1350, %v1353
        %v1356 = vadd.f32 %v1351, %v1354
        %s1357 = scalar_lea.vmem [#allocation6], 112
        %v1358 = vld [vmem:[%s1357] sm:$0xff]
        %v1359 = vld [vmem:[%s1357 + $0x8] sm:$0xff]
        %1361 = vset.pattern.permute.xlu0 0
        %1362 = vperm.xlu0 %1361, %v1358
        %v1363 = vpop.permute.xlu0 %1362
        %1366 = vset.pattern.permute.xlu0 0
        %1367 = vperm.xlu0 %1366, %v1359
        %v1368 = vpop.permute.xlu0 %1367
        %v1370 = vmul.f32 %v1355, %v1363
        %v1371 = vmul.f32 %v1356, %v1368
        %v1372 = vsel %vm477, %v1370, 0.0
        %v1373 = vsel %vm477, %v1371, 0.0
        %v1374 = vadd.f32 %v1372, %v1373
        %v1375 = vrot.slane %v1374, 4
        %v1376 = vadd.f32 %v1374, %v1375
        %v1377 = vrot.slane %v1376, 2
        %v1378 = vadd.f32 %v1376, %v1377
        %v1379 = vrot.slane %v1378, 1
        %v1380 = vadd.f32 %v1378, %v1379
        %1381 = vst.msk [vmem:[#allocation7 + $0x7] sm:$0x1] %vm1135, %v1380
        %1382 = vst.msk [vmem:[#allocation2] sm:$0xff] %vm477, %v1355
        %1383 = vst.msk [vmem:[#allocation2 + $0x8] sm:$0xff] %vm477, %v1356
        %v1384 = vld [vmem:[#allocation7] sm:$0xff]
        %v1385 = vld [vmem:[%s8] sm:$0x1]
        %v1387 = vlaneseq
        %v1388 = vshrl.u32 %v1387, 7
        %v1389 = vsub.s32 0, %v1388
        %v1390 = vrot.slane %v1385, %v1389
        %v1392 = vmul.f32 %v1390, %v526
        %v1393 = vadd.f32 %v1384, %v1392
        %v1394 = vxor.u32 %v472, 2147483648
        %v1395 = vmul.f32 %v1394, 1.442695
        %v1396 = vpow.pop %v1395
        %v1397 = vadd.f32 %v1396, 1.0
        %v1398 = vrcp.pop %v1397
        %v1399 = vmul.f32 1.0, %v1398
        %v1400 = vmul.f32 %v472, %v1399
        %1402 = vrot.lane.b32.xlu0 %v1400, 112
        %v1403 = vpop.permute.xlu0 %1402
        %v1405 = vmul.f32 %v1393, %v1403
        %v1406 = vpack.c.bf16 %v1405, %v1405
        %v1407 = vld [vmem:[%s9] sm:$0xf]
        %v1408 = vld [vmem:[%s9 + $0x4] sm:$0xf]
        %v1411 = vunpack.c.l.b16 %v1407
        %v1412 = vunpack.c.l.b16 %v1408
        %v1413 = vpack.c.b16 %v1412, %v1411
        %v1416 = vsel %vm477, %v1406, 0
        %1418 = vmatprep.subr.bf16.mxu0 0
        %1419 = vmatpush1.bf16.msra.mxu0 %v1413
        %1420 = vmatprep.subr.bf16.mxu0 0
        %1421 = vmatpush1.bf16.msra.mxu0 0
        %1422 = vmatprep.subr.bf16.mxu0 0
        %1423 = vmatpush1.bf16.msra.mxu0 0
        %1424 = vmatprep.subr.bf16.mxu0 0
        %1425 = vmatpush1.bf16.msra.mxu0 0
        %1426 = vmatprep.subr.bf16.mxu0 0
        %1427 = vmatpush1.bf16.msra.mxu0 0
        %1428 = vmatprep.subr.bf16.mxu0 0
        %1429 = vmatpush1.bf16.msra.mxu0 0
        %1430 = vmatprep.subr.bf16.mxu0 0
        %1431 = vmatpush1.bf16.msra.mxu0 0
        %1432 = vmatprep.subr.bf16.mxu0 0
        %1433 = vmatpush1.bf16.msra.mxu0 0
        %1434 = vmatprep.subr.bf16.mxu0 0
        %1435 = vmatpush1.bf16.msra.mxu0 0
        %1436 = vmatprep.subr.bf16.mxu0 0
        %1437 = vmatpush1.bf16.msra.mxu0 0
        %1438 = vmatprep.subr.bf16.mxu0 0
        %1439 = vmatpush1.bf16.msra.mxu0 0
        %1440 = vmatprep.subr.bf16.mxu0 0
        %1441 = vmatpush1.bf16.msra.mxu0 0
        %1442 = vmatprep.subr.bf16.mxu0 0
        %1443 = vmatpush1.bf16.msra.mxu0 0
        %1444 = vmatprep.subr.bf16.mxu0 0
        %1445 = vmatpush1.bf16.msra.mxu0 0
        %1446 = vmatprep.subr.bf16.mxu0 0
        %1447 = vmatpush1.bf16.msra.mxu0 0
        %1448 = vmatprep.subr.bf16.mxu0 0
        %1449 = vmatpush1.bf16.msra.mxu0 0
        %1450 = vmatprep.mubr.bf16.mxu0 0
        %1451 = vmatmul.mubr.bf16.gmra.mrb[0].mxu0 %v1416
        %v1452 = vpop.f32.mrb[0].mxu0
        %v1453 = vadd.f32 0.0, %v1452
        %v1454 = vpop.f32.mrb[0].mxu0
        %v1455 = vpop.f32.mrb[0].mxu0
        %v1456 = vpop.f32.mrb[0].mxu0
        %1457 = vdwg.mxu0
        %1458 = vst.msk [vmem:[%s416] sm:$0xff] %vm429, %v1453
        %s1459 = sand.u32 %s267, 1
        %s1460 = scalar_lea.sflag [#allocation10], %s1459
        %s1461 = sand.u32 %s267, 1
        %s1462 = smul.addr %s1461, 8
        %s1463 = scalar_lea.vmem [#allocation14], %s1462
        // Predicated region
        $region81: #{tpu_custom_call.1} parent=59 // pred_check
          %p1464 = pneg %p277
        $region82: #{tpu_custom_call.1} parent=59 // pred_check_branch
          %1466 = sbr.rel (%p1464) target = $region84
        $region83: #{tpu_custom_call.1} parent=59 // pred_region
          %s1468 = ssub.s32 128, 128
          %1469 = vsyncadd %s1460, %s1468
          %s1470 = sadd.s32 %s33, %s32
          %s1471 = smul.addr %s1470, 128
          %s1472 = scalar_lea.hbm %s10, %s1471
          %s1474 = sshll.u32 %s1463, 4
          %s1475 = int_to_ptr.vmem [resolvable:$true] %s1474
          %1477 = dma.vmem_to_hbm [thread:$0]  %s1475, 128, %s1472, %s1460
        $region84: #{tpu_custom_call.1} parent=59 // pred_fallthru
          _
      $region60: #{tpu_custom_call.1} parent=5 // pred_fallthru
        _
      %p1478 = scmp.le.s32.totalorder 2, %s23
      // Predicated region
      $region85: #{tpu_custom_call.1} parent=5 // pred_check
        %p1479 = pneg %p1478
      $region86: #{tpu_custom_call.1} parent=5 // pred_check_branch
        %1481 = sbr.rel (%p1479) target = $region88
      $region87: #{tpu_custom_call.1} parent=5 // pred_region
        %s1482 = ssub.s32 %s23, 2
        // Predicated region
        $region89: #{tpu_custom_call.1} parent=87 // pred_check
          %p1483 = pneg %p283
        $region90: #{tpu_custom_call.1} parent=87 // pred_check_branch
          %1485 = sbr.rel (%p1483) target = $region92
        $region91: #{tpu_custom_call.1} parent=87 // pred_region
          %s1486 = sand.u32 %s268, 1
          %s1487 = scalar_lea.sflag [#allocation10], %s1486
          %s1488 = sand.u32 %s268, 1
          %s1489 = smul.addr %s1488, 8
          %s1490 = scalar_lea.vmem [#allocation14], %s1489
          %1491 = dma.done %s1487, 128
        $region92: #{tpu_custom_call.1} parent=87 // pred_fallthru
          _
      $region88: #{tpu_custom_call.1} parent=5 // pred_fallthru
        _
    $region6: #{tpu_custom_call.1} parent=1 // loop_footer
      %s27 = sadd.s32 1, %s23
    $region7: #{tpu_custom_call.1} parent=1 // loop_footer_branch
      %22 = sbr.rel target = $region3
    $region8: #{tpu_custom_call.1} parent=1 // loop_exit
      _
    %1492 = vsyncpa [#allocation9], 1
    %s1493 = scalar_lea.sflag [#allocation9], 1
    %1494 = vsyncpa %s1493, 1
    %1495 = vsyncpa [#allocation12], 1
    %1496 = vsyncpa [#allocation10], 1
    %s1497 = scalar_lea.sflag [#allocation10], 1
    %1498 = vsyncpa %s1497, 1

</llo_original>
